<compile_context>
chip_gen: v5e
topology: v5e:2x2
jax: 0.10.0
libtpu: 0.0.40
codegen_flags: <defaults>
</compile_context>

<pallas_src>
import jax
import jax.numpy as jnp
import numpy as np
from jax import lax
from jax.experimental import pallas as pl
from jax.experimental.pallas import tpu as pltpu

D = 116  # number of AAL ROIs, hard-coded in the reference forward()


def _e2e_kernel(a_ref, w1_ref, w2_ref, bias_ref, out_ref):
    # a_ref   : (TB, C, H, W)  input block (NCHW, TB samples)
    # w1_ref  : (C, O, H)      w1_ref[c, o, i] = conv1xd.weight[o, c, i, 0]
    # w2_ref  : (C, O, W)      w2_ref[c, o, j] = convdx1.weight[o, c, 0, j]
    # bias_ref: (O, 1)         bias1 + bias2
    # out_ref : (TB, O, H, W)
    TB, C, H, W = a_ref.shape

    # Weights are tiny; load each channel slice once, reuse across TB samples.
    w1 = [w1_ref[c] for c in range(C)]   # each (O, H)
    w2 = [w2_ref[c] for c in range(C)]   # each (O, W)
    bias = bias_ref[...]                 # (O, 1)

    for t in range(TB):
        a_ow = None  # column-reduction term, (O, W)
        b_oh = None  # row-reduction term,    (O, H)
        for c in range(C):
            a_c = a_ref[t, c]  # (H, W) — read once, used by both reductions
            pa = jnp.dot(w1[c], a_c, preferred_element_type=jnp.float32)   # (O, W)
            pb = lax.dot_general(                                          # (O, H)
                w2[c], a_c,
                dimension_numbers=(((1,), (1,)), ((), ())),
                preferred_element_type=jnp.float32,
            )
            a_ow = pa if a_ow is None else a_ow + pa
            b_oh = pb if b_oh is None else b_oh + pb
        b_oh = b_oh + bias  # fold (b1 + b2) once into the small (O, H) term
        out_ref[t] = b_oh[:, :, None] + a_ow[:, None, :]


def _choose_tb(B, C, O, H, W, vmem_budget_bytes=24 * 1024 * 1024):
    """Largest divisor of B such that the double-buffered in+out block fits VMEM
    (conservative for v7x's 32 MiB default scoped limit) and grid length >= 2."""
    bytes_per_sample = 4 * (C * H * W + O * H * W)  # f32 input + output
    cap = max(1, vmem_budget_bytes // (2 * bytes_per_sample))
    cap = min(cap, 16, max(1, B // 2))
    tb = 1
    for t in range(1, int(cap) + 1):
        if B % t == 0:
            tb = t
    return tb


def e2e_forward(A, w1, b1, w2, b2, in_channel, d=D):
    """Pallas implementation of E2E.forward.

    A   : any shape reshapeable to (-1, in_channel, d, d), float32
    w1  : (O, C, d, 1)  conv1xd weight     b1 : (O,) bias
    w2  : (O, C, 1, d)  convdx1 weight     b2 : (O,) bias
    returns (B, O, d, d) float32 (NCHW)
    """
    A = jnp.asarray(A, jnp.float32).reshape(-1, in_channel, d, d)
    B, C, H, W = A.shape
    O = w1.shape[0]

    # Tiny weight re-layouts (plain JAX, negligible HBM traffic).
    w1_k = jnp.transpose(w1[:, :, :, 0], (1, 0, 2)).astype(jnp.float32)   # (C, O, H)
    w2_k = jnp.transpose(w2[:, :, 0, :], (1, 0, 2)).astype(jnp.float32)   # (C, O, W)
    bias = (b1 + b2).reshape(O, 1).astype(jnp.float32)                    # (O, 1)

    TB = _choose_tb(B, C, O, H, W)
    grid = (B // TB,)

    return pl.pallas_call(
        _e2e_kernel,
        out_shape=jax.ShapeDtypeStruct((B, O, H, W), jnp.float32),
        grid_spec=pltpu.PrefetchScalarGridSpec(
            num_scalar_prefetch=0,
            grid=grid,
            in_specs=[
                pl.BlockSpec((TB, C, H, W), lambda b: (b, 0, 0, 0)),
                pl.BlockSpec((C, O, H), lambda b: (0, 0, 0)),
                pl.BlockSpec((C, O, W), lambda b: (0, 0, 0)),
                pl.BlockSpec((O, 1), lambda b: (0, 0)),
            ],
            out_specs=pl.BlockSpec((TB, O, H, W), lambda b: (b, 0, 0, 0)),
        ),
        compiler_params=pltpu.CompilerParams(
            dimension_semantics=("parallel",),
        ),
    )(A, w1_k, w2_k, bias)


def e2e_reference(A, w1, b1, w2, b2, in_channel, d=D):
    """Plain-JAX reference of the PyTorch forward, for verification."""
    A = jnp.asarray(A, jnp.float32).reshape(-1, in_channel, d, d)
    a = jnp.einsum("bcij,oci->boj", A, w1[:, :, :, 0]) + b1[None, :, None]  # (B,O,W)
    b = jnp.einsum("bcij,ocj->boi", A, w2[:, :, 0, :]) + b2[None, :, None]  # (B,O,H)
    return a[:, :, None, :] + b[:, :, :, None]                              # (B,O,H,W)


if __name__ == "__main__":
    B, C, O = 4, 2, 4   # batch, in_channel, out_channel; spatial is fixed at 116

    key = jax.random.PRNGKey(0)
    k_a, k_w1, k_b1, k_w2, k_b2 = jax.random.split(key, 5)

    # Deterministic parameter init (PyTorch Conv2d-style uniform bounds).
    fan_in = C * D
    bound = 1.0 / np.sqrt(fan_in)
    w1 = jax.random.uniform(k_w1, (O, C, D, 1), jnp.float32, -bound, bound)
    b1 = jax.random.uniform(k_b1, (O,), jnp.float32, -bound, bound)
    w2 = jax.random.uniform(k_w2, (O, C, 1, D), jnp.float32, -bound, bound)
    b2 = jax.random.uniform(k_b2, (O,), jnp.float32, -bound, bound)

    x = jax.random.normal(k_a, (B, C, D, D), jnp.float32)

    out = e2e_forward(x, w1, b1, w2, b2, in_channel=C)
    out = jax.block_until_ready(out)

    ref = jax.block_until_ready(e2e_reference(x, w1, b1, w2, b2, in_channel=C))

    assert out.shape == (B, O, D, D), out.shape
    assert np.allclose(np.asarray(out), np.asarray(ref), rtol=1e-4, atol=1e-4), (
        "mismatch vs reference"
    )
    print("KERNEL_OK")
</pallas_src>

<mosaic_0001>
module attributes {stable_mosaic.version = 11 : i64} {
  func.func @_e2e_kernel(%arg0: i32, %arg1: memref<2x2x116x116xf32, #tpu.memory_space<vmem>>, %arg2: memref<2x4x116xf32, #tpu.memory_space<vmem>>, %arg3: memref<2x4x116xf32, #tpu.memory_space<vmem>>, %arg4: memref<4x1xf32, #tpu.memory_space<vmem>>, %arg5: memref<2x4x116x116xf32, #tpu.memory_space<vmem>>) attributes {dimension_semantics = [#tpu.dimension_semantics<parallel>], iteration_bounds = array<i64: 2>, scalar_prefetch = 0 : i64, scratch_operands = 0 : i64, tpu.core_type = #tpu.core_type<tc>, window_params = [{transform_indices = @transform_0, window_bounds = array<i64: 2, 2, 116, 116>}, {pipeline_mode = #tpu.pipeline_mode<synchronous>, transform_indices = @transform_1, window_bounds = array<i64: 2, 4, 116>}, {pipeline_mode = #tpu.pipeline_mode<synchronous>, transform_indices = @transform_2, window_bounds = array<i64: 2, 4, 116>}, {pipeline_mode = #tpu.pipeline_mode<synchronous>, transform_indices = @transform_3, window_bounds = array<i64: 4, 1>}, {transform_indices = @transform_4, window_bounds = array<i64: 2, 4, 116, 116>}]} {
    %c0 = arith.constant 0 : index
    %c0_0 = arith.constant 0 : index
    %c0_1 = arith.constant 0 : index
    %0 = vector.load %arg2[%c0, %c0_0, %c0_1] : memref<2x4x116xf32, #tpu.memory_space<vmem>>, vector<1x4x116xf32>
    %1 = vector.shape_cast %0 : vector<1x4x116xf32> to vector<4x116xf32>
    %c1 = arith.constant 1 : index
    %c0_2 = arith.constant 0 : index
    %c0_3 = arith.constant 0 : index
    %2 = vector.load %arg2[%c1, %c0_2, %c0_3] : memref<2x4x116xf32, #tpu.memory_space<vmem>>, vector<1x4x116xf32>
    %3 = vector.shape_cast %2 : vector<1x4x116xf32> to vector<4x116xf32>
    %c0_4 = arith.constant 0 : index
    %c0_5 = arith.constant 0 : index
    %c0_6 = arith.constant 0 : index
    %4 = vector.load %arg3[%c0_4, %c0_5, %c0_6] : memref<2x4x116xf32, #tpu.memory_space<vmem>>, vector<1x4x116xf32>
    %5 = vector.shape_cast %4 : vector<1x4x116xf32> to vector<4x116xf32>
    %c1_7 = arith.constant 1 : index
    %c0_8 = arith.constant 0 : index
    %c0_9 = arith.constant 0 : index
    %6 = vector.load %arg3[%c1_7, %c0_8, %c0_9] : memref<2x4x116xf32, #tpu.memory_space<vmem>>, vector<1x4x116xf32>
    %7 = vector.shape_cast %6 : vector<1x4x116xf32> to vector<4x116xf32>
    %c0_10 = arith.constant 0 : index
    %c0_11 = arith.constant 0 : index
    %8 = vector.load %arg4[%c0_10, %c0_11] : memref<4x1xf32, #tpu.memory_space<vmem>>, vector<4x1xf32>
    %c0_12 = arith.constant 0 : index
    %c0_13 = arith.constant 0 : index
    %c0_14 = arith.constant 0 : index
    %c0_15 = arith.constant 0 : index
    %9 = vector.load %arg1[%c0_12, %c0_13, %c0_14, %c0_15] : memref<2x2x116x116xf32, #tpu.memory_space<vmem>>, vector<1x1x116x116xf32>
    %10 = vector.shape_cast %9 : vector<1x1x116x116xf32> to vector<116x116xf32>
    %cst = arith.constant dense<0.000000e+00> : vector<4x116xf32>
    %11 = tpu.matmul %1, %10, %cst {dimension_numbers = #tpu.dot_dimension_numbers<[1], [0], [0], [1], [0, 0, 1, 1], [], []>} : vector<4x116xf32>, vector<116x116xf32>, vector<4x116xf32> -> vector<4x116xf32>
    %cst_16 = arith.constant dense<0.000000e+00> : vector<4x116xf32>
    %12 = tpu.matmul %5, %10, %cst_16 {dimension_numbers = #tpu.dot_dimension_numbers<[1], [1], [0], [0], [0, 0, 1, 0], [], []>} : vector<4x116xf32>, vector<116x116xf32>, vector<4x116xf32> -> vector<4x116xf32>
    %c0_17 = arith.constant 0 : index
    %c1_18 = arith.constant 1 : index
    %c0_19 = arith.constant 0 : index
    %c0_20 = arith.constant 0 : index
    %13 = vector.load %arg1[%c0_17, %c1_18, %c0_19, %c0_20] : memref<2x2x116x116xf32, #tpu.memory_space<vmem>>, vector<1x1x116x116xf32>
    %14 = vector.shape_cast %13 : vector<1x1x116x116xf32> to vector<116x116xf32>
    %cst_21 = arith.constant dense<0.000000e+00> : vector<4x116xf32>
    %15 = tpu.matmul %3, %14, %cst_21 {dimension_numbers = #tpu.dot_dimension_numbers<[1], [0], [0], [1], [0, 0, 1, 1], [], []>} : vector<4x116xf32>, vector<116x116xf32>, vector<4x116xf32> -> vector<4x116xf32>
    %cst_22 = arith.constant dense<0.000000e+00> : vector<4x116xf32>
    %16 = tpu.matmul %7, %14, %cst_22 {dimension_numbers = #tpu.dot_dimension_numbers<[1], [1], [0], [0], [0, 0, 1, 0], [], []>} : vector<4x116xf32>, vector<116x116xf32>, vector<4x116xf32> -> vector<4x116xf32>
    %17 = arith.addf %11, %15 : vector<4x116xf32>
    %18 = arith.addf %12, %16 : vector<4x116xf32>
    %19 = vector.broadcast %8 : vector<4x1xf32> to vector<4x116xf32>
    %20 = arith.addf %18, %19 : vector<4x116xf32>
    %21 = vector.shape_cast %20 : vector<4x116xf32> to vector<4x116x1xf32>
    %22 = vector.shape_cast %17 : vector<4x116xf32> to vector<4x1x116xf32>
    %23 = vector.broadcast %21 : vector<4x116x1xf32> to vector<4x116x116xf32>
    %24 = vector.broadcast %22 : vector<4x1x116xf32> to vector<4x116x116xf32>
    %25 = arith.addf %23, %24 : vector<4x116x116xf32>
    %c0_23 = arith.constant 0 : index
    %c0_24 = arith.constant 0 : index
    %c0_25 = arith.constant 0 : index
    %c0_26 = arith.constant 0 : index
    %26 = vector.load %arg5[%c0_23, %c0_24, %c0_25, %c0_26] : memref<2x4x116x116xf32, #tpu.memory_space<vmem>>, vector<1x4x116x116xf32>
    %27 = vector.shape_cast %26 : vector<1x4x116x116xf32> to vector<4x116x116xf32>
    %28 = vector.shape_cast %25 : vector<4x116x116xf32> to vector<1x4x116x116xf32>
    tpu.vector_store %arg5[%c0_23, %c0_24, %c0_25, %c0_26], %28 {strides = array<i32>} : memref<2x4x116x116xf32, #tpu.memory_space<vmem>>, vector<1x4x116x116xf32>,
    %c1_27 = arith.constant 1 : index
    %c0_28 = arith.constant 0 : index
    %c0_29 = arith.constant 0 : index
    %c0_30 = arith.constant 0 : index
    %29 = vector.load %arg1[%c1_27, %c0_28, %c0_29, %c0_30] : memref<2x2x116x116xf32, #tpu.memory_space<vmem>>, vector<1x1x116x116xf32>
    %30 = vector.shape_cast %29 : vector<1x1x116x116xf32> to vector<116x116xf32>
    %cst_31 = arith.constant dense<0.000000e+00> : vector<4x116xf32>
    %31 = tpu.matmul %1, %30, %cst_31 {dimension_numbers = #tpu.dot_dimension_numbers<[1], [0], [0], [1], [0, 0, 1, 1], [], []>} : vector<4x116xf32>, vector<116x116xf32>, vector<4x116xf32> -> vector<4x116xf32>
    %cst_32 = arith.constant dense<0.000000e+00> : vector<4x116xf32>
    %32 = tpu.matmul %5, %30, %cst_32 {dimension_numbers = #tpu.dot_dimension_numbers<[1], [1], [0], [0], [0, 0, 1, 0], [], []>} : vector<4x116xf32>, vector<116x116xf32>, vector<4x116xf32> -> vector<4x116xf32>
    %c1_33 = arith.constant 1 : index
    %c1_34 = arith.constant 1 : index
    %c0_35 = arith.constant 0 : index
    %c0_36 = arith.constant 0 : index
    %33 = vector.load %arg1[%c1_33, %c1_34, %c0_35, %c0_36] : memref<2x2x116x116xf32, #tpu.memory_space<vmem>>, vector<1x1x116x116xf32>
    %34 = vector.shape_cast %33 : vector<1x1x116x116xf32> to vector<116x116xf32>
    %cst_37 = arith.constant dense<0.000000e+00> : vector<4x116xf32>
    %35 = tpu.matmul %3, %34, %cst_37 {dimension_numbers = #tpu.dot_dimension_numbers<[1], [0], [0], [1], [0, 0, 1, 1], [], []>} : vector<4x116xf32>, vector<116x116xf32>, vector<4x116xf32> -> vector<4x116xf32>
    %cst_38 = arith.constant dense<0.000000e+00> : vector<4x116xf32>
    %36 = tpu.matmul %7, %34, %cst_38 {dimension_numbers = #tpu.dot_dimension_numbers<[1], [1], [0], [0], [0, 0, 1, 0], [], []>} : vector<4x116xf32>, vector<116x116xf32>, vector<4x116xf32> -> vector<4x116xf32>
    %37 = arith.addf %31, %35 : vector<4x116xf32>
    %38 = arith.addf %32, %36 : vector<4x116xf32>
    %39 = vector.broadcast %8 : vector<4x1xf32> to vector<4x116xf32>
    %40 = arith.addf %38, %39 : vector<4x116xf32>
    %41 = vector.shape_cast %40 : vector<4x116xf32> to vector<4x116x1xf32>
    %42 = vector.shape_cast %37 : vector<4x116xf32> to vector<4x1x116xf32>
    %43 = vector.broadcast %41 : vector<4x116x1xf32> to vector<4x116x116xf32>
    %44 = vector.broadcast %42 : vector<4x1x116xf32> to vector<4x116x116xf32>
    %45 = arith.addf %43, %44 : vector<4x116x116xf32>
    %c1_39 = arith.constant 1 : index
    %c0_40 = arith.constant 0 : index
    %c0_41 = arith.constant 0 : index
    %c0_42 = arith.constant 0 : index
    %46 = vector.load %arg5[%c1_39, %c0_40, %c0_41, %c0_42] : memref<2x4x116x116xf32, #tpu.memory_space<vmem>>, vector<1x4x116x116xf32>
    %47 = vector.shape_cast %46 : vector<1x4x116x116xf32> to vector<4x116x116xf32>
    %48 = vector.shape_cast %45 : vector<4x116x116xf32> to vector<1x4x116x116xf32>
    tpu.vector_store %arg5[%c1_39, %c0_40, %c0_41, %c0_42], %48 {strides = array<i32>} : memref<2x4x116x116xf32, #tpu.memory_space<vmem>>, vector<1x4x116x116xf32>,
    return
  }
  func.func @transform_0(%arg0: i32) -> (i32, i32, i32, i32) {
    %c0_i32 = arith.constant 0 : i32
    %c0_i32_0 = arith.constant 0 : i32
    %c0_i32_1 = arith.constant 0 : i32
    %c0_i32_2 = arith.constant 0 : i32
    return %arg0, %c0_i32, %c0_i32_0, %c0_i32_1 : i32, i32, i32, i32
  }
  func.func @transform_1(%arg0: i32) -> (i32, i32, i32) {
    %c0_i32 = arith.constant 0 : i32
    %c0_i32_0 = arith.constant 0 : i32
    %c0_i32_1 = arith.constant 0 : i32
    %c0_i32_2 = arith.constant 0 : i32
    return %c0_i32, %c0_i32_0, %c0_i32_1 : i32, i32, i32
  }
  func.func @transform_2(%arg0: i32) -> (i32, i32, i32) {
    %c0_i32 = arith.constant 0 : i32
    %c0_i32_0 = arith.constant 0 : i32
    %c0_i32_1 = arith.constant 0 : i32
    %c0_i32_2 = arith.constant 0 : i32
    return %c0_i32, %c0_i32_0, %c0_i32_1 : i32, i32, i32
  }
  func.func @transform_3(%arg0: i32) -> (i32, i32) {
    %c0_i32 = arith.constant 0 : i32
    %c0_i32_0 = arith.constant 0 : i32
    %c0_i32_1 = arith.constant 0 : i32
    return %c0_i32, %c0_i32_0 : i32, i32
  }
  func.func @transform_4(%arg0: i32) -> (i32, i32, i32, i32) {
    %c0_i32 = arith.constant 0 : i32
    %c0_i32_0 = arith.constant 0 : i32
    %c0_i32_1 = arith.constant 0 : i32
    %c0_i32_2 = arith.constant 0 : i32
    return %arg0, %c0_i32, %c0_i32_0, %c0_i32_1 : i32, i32, i32, i32
  }
}

</mosaic_0001>

<llo_original>
// kernel: tpu_custom_call.1
$region0: #{tpu_custom_call.1}
  #allocation0 [shape = 'u32[]', space=smem, size = 0x4, offset = 0x4, fixed_abs, tag = 'smem constant byte address 0x4 - core index']
  #allocation1 [shape = 'u32[72,128]{1,0:T(1,128)}', space=vmem, size = 0x9000, scoped, tag = 'internal scratch']
  %s0 = inlined_call_operand.vmem [shape: f32[4,2,116,116], index: 0, kind: input, shape index: {}]
  %s1 = inlined_call_operand.vmem [shape: f32[2,4,116], index: 1, kind: input, shape index: {}]
  %s2 = inlined_call_operand.vmem [shape: f32[2,4,116], index: 2, kind: input, shape index: {}]
  %s3 = inlined_call_operand.vmem [shape: f32[4,1], index: 3, kind: input, shape index: {}]
  %s4 = inlined_call_operand.vmem [shape: f32[4,4,116,116], index: 4, kind: output, shape index: {}]
  %s5 = sld [smem:[#allocation0]]
  $region49: #{tpu_custom_call.1} parent=0
    _
  %s7 = ssub.s32 1, %s5
  %s8 = scalar_select 0, %s7, %s5
  loop: start=0, step=1, limit=4
  $region2: #{tpu_custom_call.1} parent=0 // loop_pre_header
    _
  $region3: #{tpu_custom_call.1} parent=0 // loop_header
    %s10 = sphi 0, %s14
    %p11 = scmp.ge.s32.totalorder %s10, 4
    %s20 = sphi 0, %s22
    %s23 = sphi 0, %s20
    %s24 = sphi 0, %s23
    %s40 = sphi 0, %s24
    %s44 = sphi 0, %s44
    %s46 = sphi 0, %s44
    %s47 = sphi 0, %s46
    %s61 = sphi 0, %s47
    %s65 = sphi 0, %s65
    %s67 = sphi 0, %s65
    %s68 = sphi 0, %s67
    %s82 = sphi 0, %s68
    %s86 = sphi 0, %s86
    %s88 = sphi 0, %s86
    %s89 = sphi 0, %s88
    %s103 = sphi 0, %s89
    %s109 = sphi 0, %s111
    %s112 = sphi 0, %s109
    %s113 = sphi 0, %s112
    %s129 = sphi 0, %s113
  $region4: #{tpu_custom_call.1} parent=0 // loop_header_branch
    %13 = sbr.rel (%p11) target = $region8
  $region5: #{tpu_custom_call.1} parent=0 // loop_body
    %s15 = ssub.s32 %s10, 1
    %s16 = ssub.s32 %s10, 2
    %s17 = sadd.s32 %s10, 1
    %s18 = ssub.s32 %s10, %s17
    %p19 = scmp.eq.s32.totalorder %s18, 0
    %s21 = sadd.s32 %s20, 1
    %s22 = scalar_select %p19, %s20, %s21
    %p25 = pneg %p19
    %p26 = scmp.eq.s32.totalorder %s10, 1
    %p27 = por %p25, %p26
    %p28 = scmp.ne.s32.totalorder %s20, %s23
    %p29 = scmp.eq.s32.totalorder %s10, 0
    %p30 = por %p28, %p29
    %p31 = scmp.ne.s32.totalorder %s20, %s23
    %p32 = scmp.eq.s32.totalorder %s15, 1
    %p33 = por %p31, %p32
    %p34 = scmp.ne.s32.totalorder %s23, %s24
    %p35 = scmp.eq.s32.totalorder %s15, 0
    %p36 = por %p34, %p35
    %p37 = scmp.ne.s32.totalorder %s23, %s24
    %p38 = scmp.eq.s32.totalorder %s16, 1
    %p39 = por %p37, %p38
    %p41 = scmp.ne.s32.totalorder %s24, %s40
    %p42 = scmp.eq.s32.totalorder %s16, 0
    %p43 = por %p41, %p42
    %s45 = sadd.s32 %s44, 1
    %p48 = scmp.eq.s32.totalorder %s10, 1
    %p49 = scmp.ne.s32.totalorder %s44, %s46
    %p50 = scmp.eq.s32.totalorder %s10, 0
    %p51 = por %p49, %p50
    %p52 = scmp.ne.s32.totalorder %s44, %s46
    %p53 = scmp.eq.s32.totalorder %s15, 1
    %p54 = por %p52, %p53
    %p55 = scmp.ne.s32.totalorder %s46, %s47
    %p56 = scmp.eq.s32.totalorder %s15, 0
    %p57 = por %p55, %p56
    %p58 = scmp.ne.s32.totalorder %s46, %s47
    %p59 = scmp.eq.s32.totalorder %s16, 1
    %p60 = por %p58, %p59
    %p62 = scmp.ne.s32.totalorder %s47, %s61
    %p63 = scmp.eq.s32.totalorder %s16, 0
    %p64 = por %p62, %p63
    %s66 = sadd.s32 %s65, 1
    %p69 = scmp.eq.s32.totalorder %s10, 1
    %p70 = scmp.ne.s32.totalorder %s65, %s67
    %p71 = scmp.eq.s32.totalorder %s10, 0
    %p72 = por %p70, %p71
    %p73 = scmp.ne.s32.totalorder %s65, %s67
    %p74 = scmp.eq.s32.totalorder %s15, 1
    %p75 = por %p73, %p74
    %p76 = scmp.ne.s32.totalorder %s67, %s68
    %p77 = scmp.eq.s32.totalorder %s15, 0
    %p78 = por %p76, %p77
    %p79 = scmp.ne.s32.totalorder %s67, %s68
    %p80 = scmp.eq.s32.totalorder %s16, 1
    %p81 = por %p79, %p80
    %p83 = scmp.ne.s32.totalorder %s68, %s82
    %p84 = scmp.eq.s32.totalorder %s16, 0
    %p85 = por %p83, %p84
    %s87 = sadd.s32 %s86, 1
    %p90 = scmp.eq.s32.totalorder %s10, 1
    %p91 = scmp.ne.s32.totalorder %s86, %s88
    %p92 = scmp.eq.s32.totalorder %s10, 0
    %p93 = por %p91, %p92
    %p94 = scmp.ne.s32.totalorder %s86, %s88
    %p95 = scmp.eq.s32.totalorder %s15, 1
    %p96 = por %p94, %p95
    %p97 = scmp.ne.s32.totalorder %s88, %s89
    %p98 = scmp.eq.s32.totalorder %s15, 0
    %p99 = por %p97, %p98
    %p100 = scmp.ne.s32.totalorder %s88, %s89
    %p101 = scmp.eq.s32.totalorder %s16, 1
    %p102 = por %p100, %p101
    %p104 = scmp.ne.s32.totalorder %s89, %s103
    %p105 = scmp.eq.s32.totalorder %s16, 0
    %p106 = por %p104, %p105
    %s107 = ssub.s32 %s10, %s17
    %p108 = scmp.eq.s32.totalorder %s107, 0
    %s110 = sadd.s32 %s109, 1
    %s111 = scalar_select %p108, %s109, %s110
    %p114 = pneg %p108
    %p115 = scmp.eq.s32.totalorder %s10, 1
    %p116 = por %p114, %p115
    %p117 = scmp.ne.s32.totalorder %s109, %s112
    %p118 = scmp.eq.s32.totalorder %s10, 0
    %p119 = por %p117, %p118
    %p120 = scmp.ne.s32.totalorder %s109, %s112
    %p121 = scmp.eq.s32.totalorder %s15, 1
    %p122 = por %p120, %p121
    %p123 = scmp.ne.s32.totalorder %s112, %s113
    %p124 = scmp.eq.s32.totalorder %s15, 0
    %p125 = por %p123, %p124
    %p126 = scmp.ne.s32.totalorder %s112, %s113
    %p127 = scmp.eq.s32.totalorder %s16, 1
    %p128 = por %p126, %p127
    %p130 = scmp.ne.s32.totalorder %s113, %s129
    %p131 = scmp.eq.s32.totalorder %s16, 0
    %p132 = por %p130, %p131
    %p133 = scmp.le.s32.totalorder 1, %s10
    %p134 = scmp.lt.s32.totalorder %s10, 3
    %p135 = pnand %p133, %p134
    %p136 = pneg %p135
    // Predicated region
    $region9: #{tpu_custom_call.1} parent=5 // pred_check
      _
    $region10: #{tpu_custom_call.1} parent=5 // pred_check_branch
      %138 = sbr.rel (%p135) target = $region12
    $region11: #{tpu_custom_call.1} parent=5 // pred_region
      %s139 = ssub.s32 %s10, 1
      // Predicated region
      $region13: #{tpu_custom_call.1} parent=11 // pred_check
        %p140 = pneg %p57
      $region14: #{tpu_custom_call.1} parent=11 // pred_check_branch
        %142 = sbr.rel (%p140) target = $region16
      $region15: #{tpu_custom_call.1} parent=11 // pred_region
        _
      $region16: #{tpu_custom_call.1} parent=11 // pred_fallthru
        _
      // Predicated region
      $region17: #{tpu_custom_call.1} parent=11 // pred_check
        %p143 = pneg %p78
      $region18: #{tpu_custom_call.1} parent=11 // pred_check_branch
        %145 = sbr.rel (%p143) target = $region20
      $region19: #{tpu_custom_call.1} parent=11 // pred_region
        _
      $region20: #{tpu_custom_call.1} parent=11 // pred_fallthru
        _
      // Predicated region
      $region21: #{tpu_custom_call.1} parent=11 // pred_check
        %p146 = pneg %p99
      $region22: #{tpu_custom_call.1} parent=11 // pred_check_branch
        %148 = sbr.rel (%p146) target = $region24
      $region23: #{tpu_custom_call.1} parent=11 // pred_region
        _
      $region24: #{tpu_custom_call.1} parent=11 // pred_fallthru
        _
    $region12: #{tpu_custom_call.1} parent=5 // pred_fallthru
      _
    %p149 = scmp.lt.s32.totalorder %s10, 2
    // Predicated region
    $region25: #{tpu_custom_call.1} parent=5 // pred_check
      %p150 = pneg %p149
    $region26: #{tpu_custom_call.1} parent=5 // pred_check_branch
      %152 = sbr.rel (%p150) target = $region28
    $region27: #{tpu_custom_call.1} parent=5 // pred_region
      // Predicated region
      $region29: #{tpu_custom_call.1} parent=27 // pred_check
        %p153 = pneg %p30
      $region30: #{tpu_custom_call.1} parent=27 // pred_check_branch
        %155 = sbr.rel (%p153) target = $region32
      $region31: #{tpu_custom_call.1} parent=27 // pred_region
        %s156 = smul.u32 2, %s10
        %p157 = scmp.lt.s32.totalorder %s156, 3
        %s158 = scalar_select %p157, %s156, 3
        %s159 = smul.addr %s158, 30
        %s160 = smul.addr %s159, 8
        %s161 = scalar_lea.vmem %s0, %s160
        %s162 = smul.u32 2, %s10
      $region32: #{tpu_custom_call.1} parent=27 // pred_fallthru
        _
    $region28: #{tpu_custom_call.1} parent=5 // pred_fallthru
      _
    %p163 = scmp.le.s32.totalorder 1, %s10
    %p164 = scmp.lt.s32.totalorder %s10, 3
    %p165 = pnand %p163, %p164
    %p166 = pneg %p165
    // Predicated region
    $region33: #{tpu_custom_call.1} parent=5 // pred_check
      _
    $region34: #{tpu_custom_call.1} parent=5 // pred_check_branch
      %168 = sbr.rel (%p165) target = $region36
    $region35: #{tpu_custom_call.1} parent=5 // pred_region
      %s169 = ssub.s32 %s10, 1
      %s170 = smul.u32 2, %s15
      %p171 = scmp.lt.s32.totalorder %s170, 3
      %s172 = scalar_select %p171, %s170, 3
      %s173 = smul.addr %s172, 30
      %s174 = smul.addr %s173, 8
      %s175 = scalar_lea.vmem %s0, %s174
      %p176 = pneg %p36
      %p177 = pneg %p33
      %p178 = pneg %p57
      %p179 = pneg %p54
      %p180 = pneg %p78
      %p181 = pneg %p75
      %p182 = pneg %p99
      %p183 = pneg %p96
      %p184 = pneg %p125
      %p185 = pneg %p122
      %s186 = smul.u32 2, %s15
      %p187 = scmp.lt.s32.totalorder %s186, 3
      %s188 = scalar_select %p187, %s186, 3
      %s189 = smul.addr %s188, 60
      %s190 = smul.addr %s189, 8
      %s191 = scalar_lea.vmem %s4, %s190
      %s192 = smul.u32 2, %s15
      %p193 = scmp.lt.s32.totalorder %s192, 3
      %s194 = scalar_select %p193, %s192, 3
      %s195 = smul.addr %s194, 30
      %s196 = smul.addr %s195, 8
      %s197 = scalar_lea.vmem %s0, %s196
      %s198 = smul.u32 2, %s15
      %s199 = smul.u32 2, %s15
      %p200 = scmp.lt.s32.totalorder %s199, 3
      %s201 = scalar_select %p200, %s199, 3
      %s202 = smul.addr %s201, 60
      %s203 = smul.addr %s202, 8
      %s204 = scalar_lea.vmem %s4, %s203
      %s205 = smul.u32 2, %s15
      %v206 = vld [vmem:[%s1] sm:$0xf]
      %s207 = scalar_lea.vmem %s1, 4
      %v208 = vld [vmem:[%s207] sm:$0xf]
      %v209 = vld [vmem:[%s2] sm:$0xf]
      %s210 = scalar_lea.vmem %s2, 4
      %v211 = vld [vmem:[%s210] sm:$0xf]
      %v212 = vld [vmem:[%s3] sm:$0xf]
      %v213 = vld [vmem:[%s197] sm:$0xff]
      %v214 = vld [vmem:[%s197 + $0x8] sm:$0xff]
      %v215 = vld [vmem:[%s197 + $0x10] sm:$0xff]
      %v216 = vld [vmem:[%s197 + $0x18] sm:$0xff]
      %v217 = vld [vmem:[%s197 + $0x20] sm:$0xff]
      %v218 = vld [vmem:[%s197 + $0x28] sm:$0xff]
      %v219 = vld [vmem:[%s197 + $0x30] sm:$0xff]
      %v220 = vld [vmem:[%s197 + $0x38] sm:$0xff]
      %v221 = vld [vmem:[%s197 + $0x40] sm:$0xff]
      %v222 = vld [vmem:[%s197 + $0x48] sm:$0xff]
      %v223 = vld [vmem:[%s197 + $0x50] sm:$0xff]
      %v224 = vld [vmem:[%s197 + $0x58] sm:$0xff]
      %v225 = vld [vmem:[%s197 + $0x60] sm:$0xff]
      %v226 = vld [vmem:[%s197 + $0x68] sm:$0xff]
      %v227 = vld [vmem:[%s197 + $0x70] sm:$0xf]
      %s228 = scalar_lea.vmem %s197, 120
      %v229 = vld [vmem:[%s228] sm:$0xff]
      %v230 = vld [vmem:[%s228 + $0x8] sm:$0xff]
      %v231 = vld [vmem:[%s228 + $0x10] sm:$0xff]
      %v232 = vld [vmem:[%s228 + $0x18] sm:$0xff]
      %v233 = vld [vmem:[%s228 + $0x20] sm:$0xff]
      %v234 = vld [vmem:[%s228 + $0x28] sm:$0xff]
      %v235 = vld [vmem:[%s228 + $0x30] sm:$0xff]
      %v236 = vld [vmem:[%s228 + $0x38] sm:$0xff]
      %v237 = vld [vmem:[%s228 + $0x40] sm:$0xff]
      %v238 = vld [vmem:[%s228 + $0x48] sm:$0xff]
      %v239 = vld [vmem:[%s228 + $0x50] sm:$0xff]
      %v240 = vld [vmem:[%s228 + $0x58] sm:$0xff]
      %v241 = vld [vmem:[%s228 + $0x60] sm:$0xff]
      %v242 = vld [vmem:[%s228 + $0x68] sm:$0xff]
      %v243 = vld [vmem:[%s228 + $0x70] sm:$0xf]
      %vm244 = vcmask 949248
      %v246 = vsel %vm244, %v208, 0
      %vm248 = vcmask 1043456
      %v250 = vsel %vm248, %v243, 0
      %252 = vmatpush.msra.mxu0 0.0
      %253 = vmatpush.msra.mxu0 %v250
      %254 = vmatpush.msra.mxu0 %v242
      %255 = vmatpush.msra.mxu0 %v241
      %256 = vmatpush.msra.mxu0 %v240
      %257 = vmatpush.msra.mxu0 %v239
      %258 = vmatpush.msra.mxu0 %v238
      %259 = vmatpush.msra.mxu0 %v237
      %260 = vmatpush.msra.mxu0 %v236
      %261 = vmatpush.msra.mxu0 %v235
      %262 = vmatpush.msra.mxu0 %v234
      %263 = vmatpush.msra.mxu0 %v233
      %264 = vmatpush.msra.mxu0 %v232
      %265 = vmatpush.msra.mxu0 %v231
      %266 = vmatpush.msra.mxu0 %v230
      %267 = vmatpush.msra.mxu0 %v229
      %268 = vmatmul.f32.gmra.mxu0 %v246
      %v269 = vpop.f32.mrf.mxu0
      %v270 = vadd.f32 0.0, %v269
      %271 = vdwg.mxu0
      %v273 = vsel %vm244, %v211, 0
      %v276 = vsel %vm244, %v229, 0
      %v279 = vsel %vm244, %v230, 0
      %v282 = vsel %vm244, %v231, 0
      %v285 = vsel %vm244, %v232, 0
      %v288 = vsel %vm244, %v233, 0
      %v291 = vsel %vm244, %v234, 0
      %v294 = vsel %vm244, %v235, 0
      %v297 = vsel %vm244, %v236, 0
      %v300 = vsel %vm244, %v237, 0
      %v303 = vsel %vm244, %v238, 0
      %v306 = vsel %vm244, %v239, 0
      %v309 = vsel %vm244, %v240, 0
      %v312 = vsel %vm244, %v241, 0
      %v315 = vsel %vm244, %v242, 0
      %v317 = vsel %vm244, %v243, 0
      %319 = vmatpush.xpose.msra.mxu0 0.0
      %320 = vmatpush.xpose.msra.mxu0 %v317
      %321 = vmatpush.xpose.msra.mxu0 %v315
      %322 = vmatpush.xpose.msra.mxu0 %v312
      %323 = vmatpush.xpose.msra.mxu0 %v309
      %324 = vmatpush.xpose.msra.mxu0 %v306
      %325 = vmatpush.xpose.msra.mxu0 %v303
      %326 = vmatpush.xpose.msra.mxu0 %v300
      %327 = vmatpush.xpose.msra.mxu0 %v297
      %328 = vmatpush.xpose.msra.mxu0 %v294
      %329 = vmatpush.xpose.msra.mxu0 %v291
      %330 = vmatpush.xpose.msra.mxu0 %v288
      %331 = vmatpush.xpose.msra.mxu0 %v285
      %332 = vmatpush.xpose.msra.mxu0 %v282
      %333 = vmatpush.xpose.msra.mxu0 %v279
      %334 = vmatpush.xpose.msra.mxu0 %v276
      %335 = vmatmul.f32.gmra.mxu0 %v273
      %v336 = vpop.f32.mrf.mxu0
      %v337 = vadd.f32 0.0, %v336
      %338 = vdwg.mxu0
      %v340 = vsel %vm244, %v206, 0
      %v343 = vsel %vm248, %v227, 0
      %345 = vmatpush.msra.mxu0 0.0
      %346 = vmatpush.msra.mxu0 %v343
      %347 = vmatpush.msra.mxu0 %v226
      %348 = vmatpush.msra.mxu0 %v225
      %349 = vmatpush.msra.mxu0 %v224
      %350 = vmatpush.msra.mxu0 %v223
      %351 = vmatpush.msra.mxu0 %v222
      %352 = vmatpush.msra.mxu0 %v221
      %353 = vmatpush.msra.mxu0 %v220
      %354 = vmatpush.msra.mxu0 %v219
      %355 = vmatpush.msra.mxu0 %v218
      %356 = vmatpush.msra.mxu0 %v217
      %357 = vmatpush.msra.mxu0 %v216
      %358 = vmatpush.msra.mxu0 %v215
      %359 = vmatpush.msra.mxu0 %v214
      %360 = vmatpush.msra.mxu0 %v213
      %361 = vmatmul.f32.gmra.mxu0 %v340
      %v362 = vpop.f32.mrf.mxu0
      %v363 = vadd.f32 %v270, %v362
      %364 = vdwg.mxu0
      %v366 = vsel %vm244, %v209, 0
      %v369 = vsel %vm244, %v213, 0
      %v372 = vsel %vm244, %v214, 0
      %v375 = vsel %vm244, %v215, 0
      %v378 = vsel %vm244, %v216, 0
      %v381 = vsel %vm244, %v217, 0
      %v384 = vsel %vm244, %v218, 0
      %v387 = vsel %vm244, %v219, 0
      %v390 = vsel %vm244, %v220, 0
      %v393 = vsel %vm244, %v221, 0
      %v396 = vsel %vm244, %v222, 0
      %v399 = vsel %vm244, %v223, 0
      %v402 = vsel %vm244, %v224, 0
      %v405 = vsel %vm244, %v225, 0
      %v408 = vsel %vm244, %v226, 0
      %v410 = vsel %vm244, %v227, 0
      %412 = vmatpush.xpose.msra.mxu0 0.0
      %413 = vmatpush.xpose.msra.mxu0 %v410
      %414 = vmatpush.xpose.msra.mxu0 %v408
      %415 = vmatpush.xpose.msra.mxu0 %v405
      %416 = vmatpush.xpose.msra.mxu0 %v402
      %417 = vmatpush.xpose.msra.mxu0 %v399
      %418 = vmatpush.xpose.msra.mxu0 %v396
      %419 = vmatpush.xpose.msra.mxu0 %v393
      %420 = vmatpush.xpose.msra.mxu0 %v390
      %421 = vmatpush.xpose.msra.mxu0 %v387
      %422 = vmatpush.xpose.msra.mxu0 %v384
      %423 = vmatpush.xpose.msra.mxu0 %v381
      %424 = vmatpush.xpose.msra.mxu0 %v378
      %425 = vmatpush.xpose.msra.mxu0 %v375
      %426 = vmatpush.xpose.msra.mxu0 %v372
      %427 = vmatpush.xpose.msra.mxu0 %v369
      %428 = vmatmul.f32.gmra.mxu0 %v366
      %v429 = vpop.f32.mrf.mxu0
      %v430 = vadd.f32 %v337, %v429
      %431 = vdwg.mxu0
      %433 = vset.pattern.permute.xlu0 0
      %434 = vperm.xlu0 %433, %v212
      %v435 = vpop.permute.xlu0 %434
      %v437 = vadd.f32 %v430, %v435
      %v438 = vperm.slane %v437, 0
      %v439 = vlaneseq
      %v440 = vshrl.u32 %v439, 7
      %442 = vset.pattern.permute.xlu0 %v440
      %443 = vperm.xlu0 %442, %v438
      %v444 = vpop.permute.xlu0 %443
      %v445 = vlaneseq
      %v446 = vshrl.u32 %v445, 7
      %v447 = vadd.s32 %v446, 8
      %448 = vset.pattern.permute.xlu0 %v447
      %449 = vperm.xlu0 %448, %v438
      %v450 = vpop.permute.xlu0 %449
      %v451 = vlaneseq
      %v452 = vshrl.u32 %v451, 7
      %v453 = vadd.s32 %v452, 16
      %454 = vset.pattern.permute.xlu0 %v453
      %455 = vperm.xlu0 %454, %v438
      %v456 = vpop.permute.xlu0 %455
      %v457 = vlaneseq
      %v458 = vshrl.u32 %v457, 7
      %v459 = vadd.s32 %v458, 24
      %460 = vset.pattern.permute.xlu0 %v459
      %461 = vperm.xlu0 %460, %v438
      %v462 = vpop.permute.xlu0 %461
      %v463 = vlaneseq
      %v464 = vshrl.u32 %v463, 7
      %v465 = vadd.s32 %v464, 32
      %466 = vset.pattern.permute.xlu0 %v465
      %467 = vperm.xlu0 %466, %v438
      %v468 = vpop.permute.xlu0 %467
      %v469 = vlaneseq
      %v470 = vshrl.u32 %v469, 7
      %v471 = vadd.s32 %v470, 40
      %472 = vset.pattern.permute.xlu0 %v471
      %473 = vperm.xlu0 %472, %v438
      %v474 = vpop.permute.xlu0 %473
      %v475 = vlaneseq
      %v476 = vshrl.u32 %v475, 7
      %v477 = vadd.s32 %v476, 48
      %478 = vset.pattern.permute.xlu0 %v477
      %479 = vperm.xlu0 %478, %v438
      %v480 = vpop.permute.xlu0 %479
      %v481 = vlaneseq
      %v482 = vshrl.u32 %v481, 7
      %v483 = vadd.s32 %v482, 56
      %484 = vset.pattern.permute.xlu0 %v483
      %485 = vperm.xlu0 %484, %v438
      %v486 = vpop.permute.xlu0 %485
      %v487 = vlaneseq
      %v488 = vshrl.u32 %v487, 7
      %v489 = vadd.s32 %v488, 64
      %490 = vset.pattern.permute.xlu0 %v489
      %491 = vperm.xlu0 %490, %v438
      %v492 = vpop.permute.xlu0 %491
      %v493 = vlaneseq
      %v494 = vshrl.u32 %v493, 7
      %v495 = vadd.s32 %v494, 72
      %496 = vset.pattern.permute.xlu0 %v495
      %497 = vperm.xlu0 %496, %v438
      %v498 = vpop.permute.xlu0 %497
      %v499 = vlaneseq
      %v500 = vshrl.u32 %v499, 7
      %v501 = vadd.s32 %v500, 80
      %502 = vset.pattern.permute.xlu0 %v501
      %503 = vperm.xlu0 %502, %v438
      %v504 = vpop.permute.xlu0 %503
      %v505 = vlaneseq
      %v506 = vshrl.u32 %v505, 7
      %v507 = vadd.s32 %v506, 88
      %508 = vset.pattern.permute.xlu0 %v507
      %509 = vperm.xlu0 %508, %v438
      %v510 = vpop.permute.xlu0 %509
      %v511 = vlaneseq
      %v512 = vshrl.u32 %v511, 7
      %v513 = vadd.s32 %v512, 96
      %514 = vset.pattern.permute.xlu0 %v513
      %515 = vperm.xlu0 %514, %v438
      %v516 = vpop.permute.xlu0 %515
      %v517 = vlaneseq
      %v518 = vshrl.u32 %v517, 7
      %v519 = vadd.s32 %v518, 104
      %520 = vset.pattern.permute.xlu0 %v519
      %521 = vperm.xlu0 %520, %v438
      %v522 = vpop.permute.xlu0 %521
      %v523 = vlaneseq
      %v524 = vshrl.u32 %v523, 7
      %v525 = vadd.s32 %v524, 112
      %526 = vset.pattern.permute.xlu0 %v525
      %527 = vperm.xlu0 %526, %v438
      %v528 = vpop.permute.xlu0 %527
      %v529 = vperm.slane %v437, 1
      %v530 = vlaneseq
      %v531 = vshrl.u32 %v530, 7
      %533 = vset.pattern.permute.xlu0 %v531
      %534 = vperm.xlu0 %533, %v529
      %v535 = vpop.permute.xlu0 %534
      %v536 = vlaneseq
      %v537 = vshrl.u32 %v536, 7
      %v538 = vadd.s32 %v537, 8
      %539 = vset.pattern.permute.xlu0 %v538
      %540 = vperm.xlu0 %539, %v529
      %v541 = vpop.permute.xlu0 %540
      %v542 = vlaneseq
      %v543 = vshrl.u32 %v542, 7
      %v544 = vadd.s32 %v543, 16
      %545 = vset.pattern.permute.xlu0 %v544
      %546 = vperm.xlu0 %545, %v529
      %v547 = vpop.permute.xlu0 %546
      %v548 = vlaneseq
      %v549 = vshrl.u32 %v548, 7
      %v550 = vadd.s32 %v549, 24
      %551 = vset.pattern.permute.xlu0 %v550
      %552 = vperm.xlu0 %551, %v529
      %v553 = vpop.permute.xlu0 %552
      %v554 = vlaneseq
      %v555 = vshrl.u32 %v554, 7
      %v556 = vadd.s32 %v555, 32
      %557 = vset.pattern.permute.xlu0 %v556
      %558 = vperm.xlu0 %557, %v529
      %v559 = vpop.permute.xlu0 %558
      %v560 = vlaneseq
      %v561 = vshrl.u32 %v560, 7
      %v562 = vadd.s32 %v561, 40
      %563 = vset.pattern.permute.xlu0 %v562
      %564 = vperm.xlu0 %563, %v529
      %v565 = vpop.permute.xlu0 %564
      %v566 = vlaneseq
      %v567 = vshrl.u32 %v566, 7
      %v568 = vadd.s32 %v567, 48
      %569 = vset.pattern.permute.xlu0 %v568
      %570 = vperm.xlu0 %569, %v529
      %v571 = vpop.permute.xlu0 %570
      %v572 = vlaneseq
      %v573 = vshrl.u32 %v572, 7
      %v574 = vadd.s32 %v573, 56
      %575 = vset.pattern.permute.xlu0 %v574
      %576 = vperm.xlu0 %575, %v529
      %v577 = vpop.permute.xlu0 %576
      %v578 = vlaneseq
      %v579 = vshrl.u32 %v578, 7
      %v580 = vadd.s32 %v579, 64
      %581 = vset.pattern.permute.xlu0 %v580
      %582 = vperm.xlu0 %581, %v529
      %v583 = vpop.permute.xlu0 %582
      %v584 = vlaneseq
      %v585 = vshrl.u32 %v584, 7
      %v586 = vadd.s32 %v585, 72
      %587 = vset.pattern.permute.xlu0 %v586
      %588 = vperm.xlu0 %587, %v529
      %v589 = vpop.permute.xlu0 %588
      %v590 = vlaneseq
      %v591 = vshrl.u32 %v590, 7
      %v592 = vadd.s32 %v591, 80
      %593 = vset.pattern.permute.xlu0 %v592
      %594 = vperm.xlu0 %593, %v529
      %v595 = vpop.permute.xlu0 %594
      %v596 = vlaneseq
      %v597 = vshrl.u32 %v596, 7
      %v598 = vadd.s32 %v597, 88
      %599 = vset.pattern.permute.xlu0 %v598
      %600 = vperm.xlu0 %599, %v529
      %v601 = vpop.permute.xlu0 %600
      %v602 = vlaneseq
      %v603 = vshrl.u32 %v602, 7
      %v604 = vadd.s32 %v603, 96
      %605 = vset.pattern.permute.xlu0 %v604
      %606 = vperm.xlu0 %605, %v529
      %v607 = vpop.permute.xlu0 %606
      %v608 = vlaneseq
      %v609 = vshrl.u32 %v608, 7
      %v610 = vadd.s32 %v609, 104
      %611 = vset.pattern.permute.xlu0 %v610
      %612 = vperm.xlu0 %611, %v529
      %v613 = vpop.permute.xlu0 %612
      %v614 = vlaneseq
      %v615 = vshrl.u32 %v614, 7
      %v616 = vadd.s32 %v615, 112
      %617 = vset.pattern.permute.xlu0 %v616
      %618 = vperm.xlu0 %617, %v529
      %v619 = vpop.permute.xlu0 %618
      %v620 = vperm.slane %v437, 2
      %v621 = vlaneseq
      %v622 = vshrl.u32 %v621, 7
      %624 = vset.pattern.permute.xlu0 %v622
      %625 = vperm.xlu0 %624, %v620
      %v626 = vpop.permute.xlu0 %625
      %v627 = vlaneseq
      %v628 = vshrl.u32 %v627, 7
      %v629 = vadd.s32 %v628, 8
      %630 = vset.pattern.permute.xlu0 %v629
      %631 = vperm.xlu0 %630, %v620
      %v632 = vpop.permute.xlu0 %631
      %v633 = vlaneseq
      %v634 = vshrl.u32 %v633, 7
      %v635 = vadd.s32 %v634, 16
      %636 = vset.pattern.permute.xlu0 %v635
      %637 = vperm.xlu0 %636, %v620
      %v638 = vpop.permute.xlu0 %637
      %v639 = vlaneseq
      %v640 = vshrl.u32 %v639, 7
      %v641 = vadd.s32 %v640, 24
      %642 = vset.pattern.permute.xlu0 %v641
      %643 = vperm.xlu0 %642, %v620
      %v644 = vpop.permute.xlu0 %643
      %v645 = vlaneseq
      %v646 = vshrl.u32 %v645, 7
      %v647 = vadd.s32 %v646, 32
      %648 = vset.pattern.permute.xlu0 %v647
      %649 = vperm.xlu0 %648, %v620
      %v650 = vpop.permute.xlu0 %649
      %v651 = vlaneseq
      %v652 = vshrl.u32 %v651, 7
      %v653 = vadd.s32 %v652, 40
      %654 = vset.pattern.permute.xlu0 %v653
      %655 = vperm.xlu0 %654, %v620
      %v656 = vpop.permute.xlu0 %655
      %v657 = vlaneseq
      %v658 = vshrl.u32 %v657, 7
      %v659 = vadd.s32 %v658, 48
      %660 = vset.pattern.permute.xlu0 %v659
      %661 = vperm.xlu0 %660, %v620
      %v662 = vpop.permute.xlu0 %661
      %v663 = vlaneseq
      %v664 = vshrl.u32 %v663, 7
      %v665 = vadd.s32 %v664, 56
      %666 = vset.pattern.permute.xlu0 %v665
      %667 = vperm.xlu0 %666, %v620
      %v668 = vpop.permute.xlu0 %667
      %v669 = vlaneseq
      %v670 = vshrl.u32 %v669, 7
      %v671 = vadd.s32 %v670, 64
      %672 = vset.pattern.permute.xlu0 %v671
      %673 = vperm.xlu0 %672, %v620
      %v674 = vpop.permute.xlu0 %673
      %v675 = vlaneseq
      %v676 = vshrl.u32 %v675, 7
      %v677 = vadd.s32 %v676, 72
      %678 = vset.pattern.permute.xlu0 %v677
      %679 = vperm.xlu0 %678, %v620
      %v680 = vpop.permute.xlu0 %679
      %v681 = vlaneseq
      %v682 = vshrl.u32 %v681, 7
      %v683 = vadd.s32 %v682, 80
      %684 = vset.pattern.permute.xlu0 %v683
      %685 = vperm.xlu0 %684, %v620
      %v686 = vpop.permute.xlu0 %685
      %v687 = vlaneseq
      %v688 = vshrl.u32 %v687, 7
      %v689 = vadd.s32 %v688, 88
      %690 = vset.pattern.permute.xlu0 %v689
      %691 = vperm.xlu0 %690, %v620
      %v692 = vpop.permute.xlu0 %691
      %v693 = vlaneseq
      %v694 = vshrl.u32 %v693, 7
      %v695 = vadd.s32 %v694, 96
      %696 = vset.pattern.permute.xlu0 %v695
      %697 = vperm.xlu0 %696, %v620
      %v698 = vpop.permute.xlu0 %697
      %v699 = vlaneseq
      %v700 = vshrl.u32 %v699, 7
      %v701 = vadd.s32 %v700, 104
      %702 = vset.pattern.permute.xlu0 %v701
      %703 = vperm.xlu0 %702, %v620
      %v704 = vpop.permute.xlu0 %703
      %v705 = vlaneseq
      %v706 = vshrl.u32 %v705, 7
      %v707 = vadd.s32 %v706, 112
      %708 = vset.pattern.permute.xlu0 %v707
      %709 = vperm.xlu0 %708, %v620
      %v710 = vpop.permute.xlu0 %709
      %v711 = vperm.slane %v437, 3
      %v712 = vlaneseq
      %v713 = vshrl.u32 %v712, 7
      %715 = vset.pattern.permute.xlu0 %v713
      %716 = vperm.xlu0 %715, %v711
      %v717 = vpop.permute.xlu0 %716
      %v718 = vlaneseq
      %v719 = vshrl.u32 %v718, 7
      %v720 = vadd.s32 %v719, 8
      %721 = vset.pattern.permute.xlu0 %v720
      %722 = vperm.xlu0 %721, %v711
      %v723 = vpop.permute.xlu0 %722
      %v724 = vlaneseq
      %v725 = vshrl.u32 %v724, 7
      %v726 = vadd.s32 %v725, 16
      %727 = vset.pattern.permute.xlu0 %v726
      %728 = vperm.xlu0 %727, %v711
      %v729 = vpop.permute.xlu0 %728
      %v730 = vlaneseq
      %v731 = vshrl.u32 %v730, 7
      %v732 = vadd.s32 %v731, 24
      %733 = vset.pattern.permute.xlu0 %v732
      %734 = vperm.xlu0 %733, %v711
      %v735 = vpop.permute.xlu0 %734
      %v736 = vlaneseq
      %v737 = vshrl.u32 %v736, 7
      %v738 = vadd.s32 %v737, 32
      %739 = vset.pattern.permute.xlu0 %v738
      %740 = vperm.xlu0 %739, %v711
      %v741 = vpop.permute.xlu0 %740
      %v742 = vlaneseq
      %v743 = vshrl.u32 %v742, 7
      %v744 = vadd.s32 %v743, 40
      %745 = vset.pattern.permute.xlu0 %v744
      %746 = vperm.xlu0 %745, %v711
      %v747 = vpop.permute.xlu0 %746
      %v748 = vlaneseq
      %v749 = vshrl.u32 %v748, 7
      %v750 = vadd.s32 %v749, 48
      %751 = vset.pattern.permute.xlu0 %v750
      %752 = vperm.xlu0 %751, %v711
      %v753 = vpop.permute.xlu0 %752
      %v754 = vlaneseq
      %v755 = vshrl.u32 %v754, 7
      %v756 = vadd.s32 %v755, 56
      %757 = vset.pattern.permute.xlu0 %v756
      %758 = vperm.xlu0 %757, %v711
      %v759 = vpop.permute.xlu0 %758
      %v760 = vlaneseq
      %v761 = vshrl.u32 %v760, 7
      %v762 = vadd.s32 %v761, 64
      %763 = vset.pattern.permute.xlu0 %v762
      %764 = vperm.xlu0 %763, %v711
      %v765 = vpop.permute.xlu0 %764
      %v766 = vlaneseq
      %v767 = vshrl.u32 %v766, 7
      %v768 = vadd.s32 %v767, 72
      %769 = vset.pattern.permute.xlu0 %v768
      %770 = vperm.xlu0 %769, %v711
      %v771 = vpop.permute.xlu0 %770
      %v772 = vlaneseq
      %v773 = vshrl.u32 %v772, 7
      %v774 = vadd.s32 %v773, 80
      %775 = vset.pattern.permute.xlu0 %v774
      %776 = vperm.xlu0 %775, %v711
      %v777 = vpop.permute.xlu0 %776
      %v778 = vlaneseq
      %v779 = vshrl.u32 %v778, 7
      %v780 = vadd.s32 %v779, 88
      %781 = vset.pattern.permute.xlu0 %v780
      %782 = vperm.xlu0 %781, %v711
      %v783 = vpop.permute.xlu0 %782
      %v784 = vlaneseq
      %v785 = vshrl.u32 %v784, 7
      %v786 = vadd.s32 %v785, 96
      %787 = vset.pattern.permute.xlu0 %v786
      %788 = vperm.xlu0 %787, %v711
      %v789 = vpop.permute.xlu0 %788
      %v790 = vlaneseq
      %v791 = vshrl.u32 %v790, 7
      %v792 = vadd.s32 %v791, 104
      %793 = vset.pattern.permute.xlu0 %v792
      %794 = vperm.xlu0 %793, %v711
      %v795 = vpop.permute.xlu0 %794
      %v796 = vlaneseq
      %v797 = vshrl.u32 %v796, 7
      %v798 = vadd.s32 %v797, 112
      %799 = vset.pattern.permute.xlu0 %v798
      %800 = vperm.xlu0 %799, %v711
      %v801 = vpop.permute.xlu0 %800
      %v803 = vrot.slane %v363, 1
      %v804 = vrot.slane %v363, 2
      %v805 = vrot.slane %v363, 3
      %v806 = vperm.slane %v363, 0
      %v807 = vperm.slane %v803, 0
      %v808 = vperm.slane %v804, 0
      %v809 = vperm.slane %v805, 0
      %v814 = vadd.f32 %v444, %v806
      %v815 = vadd.f32 %v450, %v806
      %v816 = vadd.f32 %v456, %v806
      %v817 = vadd.f32 %v462, %v806
      %v818 = vadd.f32 %v468, %v806
      %v819 = vadd.f32 %v474, %v806
      %v820 = vadd.f32 %v480, %v806
      %v821 = vadd.f32 %v486, %v806
      %v822 = vadd.f32 %v492, %v806
      %v823 = vadd.f32 %v498, %v806
      %v824 = vadd.f32 %v504, %v806
      %v825 = vadd.f32 %v510, %v806
      %v826 = vadd.f32 %v516, %v806
      %v827 = vadd.f32 %v522, %v806
      %v828 = vadd.f32 %v528, %v806
      %v829 = vadd.f32 %v535, %v807
      %v830 = vadd.f32 %v541, %v807
      %v831 = vadd.f32 %v547, %v807
      %v832 = vadd.f32 %v553, %v807
      %v833 = vadd.f32 %v559, %v807
      %v834 = vadd.f32 %v565, %v807
      %v835 = vadd.f32 %v571, %v807
      %v836 = vadd.f32 %v577, %v807
      %v837 = vadd.f32 %v583, %v807
      %v838 = vadd.f32 %v589, %v807
      %v839 = vadd.f32 %v595, %v807
      %v840 = vadd.f32 %v601, %v807
      %v841 = vadd.f32 %v607, %v807
      %v842 = vadd.f32 %v613, %v807
      %v843 = vadd.f32 %v619, %v807
      %v844 = vadd.f32 %v626, %v808
      %v845 = vadd.f32 %v632, %v808
      %v846 = vadd.f32 %v638, %v808
      %v847 = vadd.f32 %v644, %v808
      %v848 = vadd.f32 %v650, %v808
      %v849 = vadd.f32 %v656, %v808
      %v850 = vadd.f32 %v662, %v808
      %v851 = vadd.f32 %v668, %v808
      %v852 = vadd.f32 %v674, %v808
      %v853 = vadd.f32 %v680, %v808
      %v854 = vadd.f32 %v686, %v808
      %v855 = vadd.f32 %v692, %v808
      %v856 = vadd.f32 %v698, %v808
      %v857 = vadd.f32 %v704, %v808
      %v858 = vadd.f32 %v710, %v808
      %v859 = vadd.f32 %v717, %v809
      %v860 = vadd.f32 %v723, %v809
      %v861 = vadd.f32 %v729, %v809
      %v862 = vadd.f32 %v735, %v809
      %v863 = vadd.f32 %v741, %v809
      %v864 = vadd.f32 %v747, %v809
      %v865 = vadd.f32 %v753, %v809
      %v866 = vadd.f32 %v759, %v809
      %v867 = vadd.f32 %v765, %v809
      %v868 = vadd.f32 %v771, %v809
      %v869 = vadd.f32 %v777, %v809
      %v870 = vadd.f32 %v783, %v809
      %v871 = vadd.f32 %v789, %v809
      %v872 = vadd.f32 %v795, %v809
      %v873 = vadd.f32 %v801, %v809
      %874 = vst.msk [vmem:[%s204] sm:$0xff] %vm244, %v814
      %875 = vst.msk [vmem:[%s204 + $0x8] sm:$0xff] %vm244, %v815
      %876 = vst.msk [vmem:[%s204 + $0x10] sm:$0xff] %vm244, %v816
      %877 = vst.msk [vmem:[%s204 + $0x18] sm:$0xff] %vm244, %v817
      %878 = vst.msk [vmem:[%s204 + $0x20] sm:$0xff] %vm244, %v818
      %879 = vst.msk [vmem:[%s204 + $0x28] sm:$0xff] %vm244, %v819
      %880 = vst.msk [vmem:[%s204 + $0x30] sm:$0xff] %vm244, %v820
      %881 = vst.msk [vmem:[%s204 + $0x38] sm:$0xff] %vm244, %v821
      %882 = vst.msk [vmem:[%s204 + $0x40] sm:$0xff] %vm244, %v822
      %883 = vst.msk [vmem:[%s204 + $0x48] sm:$0xff] %vm244, %v823
      %884 = vst.msk [vmem:[%s204 + $0x50] sm:$0xff] %vm244, %v824
      %885 = vst.msk [vmem:[%s204 + $0x58] sm:$0xff] %vm244, %v825
      %886 = vst.msk [vmem:[%s204 + $0x60] sm:$0xff] %vm244, %v826
      %887 = vst.msk [vmem:[%s204 + $0x68] sm:$0xff] %vm244, %v827
      %vm888 = vcmask 945152
      %889 = vst.msk [vmem:[%s204 + $0x70] sm:$0xf] %vm888, %v828
      %890 = vst.msk [vmem:[%s204 + $0x78] sm:$0xff] %vm244, %v829
      %891 = vst.msk [vmem:[%s204 + $0x80] sm:$0xff] %vm244, %v830
      %892 = vst.msk [vmem:[%s204 + $0x88] sm:$0xff] %vm244, %v831
      %893 = vst.msk [vmem:[%s204 + $0x90] sm:$0xff] %vm244, %v832
      %894 = vst.msk [vmem:[%s204 + $0x98] sm:$0xff] %vm244, %v833
      %895 = vst.msk [vmem:[%s204 + $0xa0] sm:$0xff] %vm244, %v834
      %896 = vst.msk [vmem:[%s204 + $0xa8] sm:$0xff] %vm244, %v835
      %897 = vst.msk [vmem:[%s204 + $0xb0] sm:$0xff] %vm244, %v836
      %898 = vst.msk [vmem:[%s204 + $0xb8] sm:$0xff] %vm244, %v837
      %899 = vst.msk [vmem:[%s204 + $0xc0] sm:$0xff] %vm244, %v838
      %900 = vst.msk [vmem:[%s204 + $0xc8] sm:$0xff] %vm244, %v839
      %901 = vst.msk [vmem:[%s204 + $0xd0] sm:$0xff] %vm244, %v840
      %902 = vst.msk [vmem:[%s204 + $0xd8] sm:$0xff] %vm244, %v841
      %903 = vst.msk [vmem:[%s204 + $0xe0] sm:$0xff] %vm244, %v842
      %904 = vst.msk [vmem:[%s204 + $0xe8] sm:$0xf] %vm888, %v843
      %905 = vst.msk [vmem:[%s204 + $0xf0] sm:$0xff] %vm244, %v844
      %906 = vst.msk [vmem:[%s204 + $0xf8] sm:$0xff] %vm244, %v845
      %907 = vst.msk [vmem:[%s204 + $0x100] sm:$0xff] %vm244, %v846
      %908 = vst.msk [vmem:[%s204 + $0x108] sm:$0xff] %vm244, %v847
      %909 = vst.msk [vmem:[%s204 + $0x110] sm:$0xff] %vm244, %v848
      %910 = vst.msk [vmem:[%s204 + $0x118] sm:$0xff] %vm244, %v849
      %911 = vst.msk [vmem:[%s204 + $0x120] sm:$0xff] %vm244, %v850
      %912 = vst.msk [vmem:[%s204 + $0x128] sm:$0xff] %vm244, %v851
      %913 = vst.msk [vmem:[%s204 + $0x130] sm:$0xff] %vm244, %v852
      %914 = vst.msk [vmem:[%s204 + $0x138] sm:$0xff] %vm244, %v853
      %915 = vst.msk [vmem:[%s204 + $0x140] sm:$0xff] %vm244, %v854
      %916 = vst.msk [vmem:[%s204 + $0x148] sm:$0xff] %vm244, %v855
      %917 = vst.msk [vmem:[%s204 + $0x150] sm:$0xff] %vm244, %v856
      %918 = vst.msk [vmem:[%s204 + $0x158] sm:$0xff] %vm244, %v857
      %919 = vst.msk [vmem:[%s204 + $0x160] sm:$0xf] %vm888, %v858
      %920 = vst.msk [vmem:[%s204 + $0x168] sm:$0xff] %vm244, %v859
      %921 = vst.msk [vmem:[%s204 + $0x170] sm:$0xff] %vm244, %v860
      %922 = vst.msk [vmem:[%s204 + $0x178] sm:$0xff] %vm244, %v861
      %923 = vst.msk [vmem:[%s204 + $0x180] sm:$0xff] %vm244, %v862
      %924 = vst.msk [vmem:[%s204 + $0x188] sm:$0xff] %vm244, %v863
      %925 = vst.msk [vmem:[%s204 + $0x190] sm:$0xff] %vm244, %v864
      %926 = vst.msk [vmem:[%s204 + $0x198] sm:$0xff] %vm244, %v865
      %927 = vst.msk [vmem:[%s204 + $0x1a0] sm:$0xff] %vm244, %v866
      %928 = vst.msk [vmem:[%s204 + $0x1a8] sm:$0xff] %vm244, %v867
      %929 = vst.msk [vmem:[%s204 + $0x1b0] sm:$0xff] %vm244, %v868
      %930 = vst.msk [vmem:[%s204 + $0x1b8] sm:$0xff] %vm244, %v869
      %931 = vst.msk [vmem:[%s204 + $0x1c0] sm:$0xff] %vm244, %v870
      %932 = vst.msk [vmem:[%s204 + $0x1c8] sm:$0xff] %vm244, %v871
      %933 = vst.msk [vmem:[%s204 + $0x1d0] sm:$0xff] %vm244, %v872
      %934 = vst.msk [vmem:[%s204 + $0x1d8] sm:$0xf] %vm888, %v873
      %s935 = scalar_lea.vmem %s197, 240
      %v936 = vld [vmem:[%s935] sm:$0xff]
      %v937 = vld [vmem:[%s935 + $0x8] sm:$0xff]
      %v938 = vld [vmem:[%s935 + $0x10] sm:$0xff]
      %v939 = vld [vmem:[%s935 + $0x18] sm:$0xff]
      %v940 = vld [vmem:[%s935 + $0x20] sm:$0xff]
      %v941 = vld [vmem:[%s935 + $0x28] sm:$0xff]
      %v942 = vld [vmem:[%s935 + $0x30] sm:$0xff]
      %v943 = vld [vmem:[%s935 + $0x38] sm:$0xff]
      %v944 = vld [vmem:[%s935 + $0x40] sm:$0xff]
      %v945 = vld [vmem:[%s935 + $0x48] sm:$0xff]
      %v946 = vld [vmem:[%s935 + $0x50] sm:$0xff]
      %v947 = vld [vmem:[%s935 + $0x58] sm:$0xff]
      %v948 = vld [vmem:[%s935 + $0x60] sm:$0xff]
      %v949 = vld [vmem:[%s935 + $0x68] sm:$0xff]
      %v950 = vld [vmem:[%s935 + $0x70] sm:$0xf]
      %s951 = scalar_lea.vmem %s197, 360
      %v952 = vld [vmem:[%s951] sm:$0xff]
      %v953 = vld [vmem:[%s951 + $0x8] sm:$0xff]
      %v954 = vld [vmem:[%s951 + $0x10] sm:$0xff]
      %v955 = vld [vmem:[%s951 + $0x18] sm:$0xff]
      %v956 = vld [vmem:[%s951 + $0x20] sm:$0xff]
      %v957 = vld [vmem:[%s951 + $0x28] sm:$0xff]
      %v958 = vld [vmem:[%s951 + $0x30] sm:$0xff]
      %v959 = vld [vmem:[%s951 + $0x38] sm:$0xff]
      %v960 = vld [vmem:[%s951 + $0x40] sm:$0xff]
      %v961 = vld [vmem:[%s951 + $0x48] sm:$0xff]
      %v962 = vld [vmem:[%s951 + $0x50] sm:$0xff]
      %v963 = vld [vmem:[%s951 + $0x58] sm:$0xff]
      %v964 = vld [vmem:[%s951 + $0x60] sm:$0xff]
      %v965 = vld [vmem:[%s951 + $0x68] sm:$0xff]
      %v966 = vld [vmem:[%s951 + $0x70] sm:$0xf]
      %v968 = vsel %vm248, %v966, 0
      %970 = vmatpush.msra.mxu0 0.0
      %971 = vmatpush.msra.mxu0 %v968
      %972 = vmatpush.msra.mxu0 %v965
      %973 = vmatpush.msra.mxu0 %v964
      %974 = vmatpush.msra.mxu0 %v963
      %975 = vmatpush.msra.mxu0 %v962
      %976 = vmatpush.msra.mxu0 %v961
      %977 = vmatpush.msra.mxu0 %v960
      %978 = vmatpush.msra.mxu0 %v959
      %979 = vmatpush.msra.mxu0 %v958
      %980 = vmatpush.msra.mxu0 %v957
      %981 = vmatpush.msra.mxu0 %v956
      %982 = vmatpush.msra.mxu0 %v955
      %983 = vmatpush.msra.mxu0 %v954
      %984 = vmatpush.msra.mxu0 %v953
      %985 = vmatpush.msra.mxu0 %v952
      %986 = vmatmul.f32.gmra.mxu0 %v246
      %v987 = vpop.f32.mrf.mxu0
      %v988 = vadd.f32 0.0, %v987
      %989 = vdwg.mxu0
      %v991 = vsel %vm244, %v952, 0
      %v994 = vsel %vm244, %v953, 0
      %v997 = vsel %vm244, %v954, 0
      %v1000 = vsel %vm244, %v955, 0
      %v1003 = vsel %vm244, %v956, 0
      %v1006 = vsel %vm244, %v957, 0
      %v1009 = vsel %vm244, %v958, 0
      %v1012 = vsel %vm244, %v959, 0
      %v1015 = vsel %vm244, %v960, 0
      %v1018 = vsel %vm244, %v961, 0
      %v1021 = vsel %vm244, %v962, 0
      %v1024 = vsel %vm244, %v963, 0
      %v1027 = vsel %vm244, %v964, 0
      %v1030 = vsel %vm244, %v965, 0
      %v1032 = vsel %vm244, %v966, 0
      %1034 = vmatpush.xpose.msra.mxu0 0.0
      %1035 = vmatpush.xpose.msra.mxu0 %v1032
      %1036 = vmatpush.xpose.msra.mxu0 %v1030
      %1037 = vmatpush.xpose.msra.mxu0 %v1027
      %1038 = vmatpush.xpose.msra.mxu0 %v1024
      %1039 = vmatpush.xpose.msra.mxu0 %v1021
      %1040 = vmatpush.xpose.msra.mxu0 %v1018
      %1041 = vmatpush.xpose.msra.mxu0 %v1015
      %1042 = vmatpush.xpose.msra.mxu0 %v1012
      %1043 = vmatpush.xpose.msra.mxu0 %v1009
      %1044 = vmatpush.xpose.msra.mxu0 %v1006
      %1045 = vmatpush.xpose.msra.mxu0 %v1003
      %1046 = vmatpush.xpose.msra.mxu0 %v1000
      %1047 = vmatpush.xpose.msra.mxu0 %v997
      %1048 = vmatpush.xpose.msra.mxu0 %v994
      %1049 = vmatpush.xpose.msra.mxu0 %v991
      %1050 = vmatmul.f32.gmra.mxu0 %v273
      %v1051 = vpop.f32.mrf.mxu0
      %v1052 = vadd.f32 0.0, %v1051
      %1053 = vdwg.mxu0
      %v1055 = vsel %vm248, %v950, 0
      %1057 = vmatpush.msra.mxu0 0.0
      %1058 = vmatpush.msra.mxu0 %v1055
      %1059 = vmatpush.msra.mxu0 %v949
      %1060 = vmatpush.msra.mxu0 %v948
      %1061 = vmatpush.msra.mxu0 %v947
      %1062 = vmatpush.msra.mxu0 %v946
      %1063 = vmatpush.msra.mxu0 %v945
      %1064 = vmatpush.msra.mxu0 %v944
      %1065 = vmatpush.msra.mxu0 %v943
      %1066 = vmatpush.msra.mxu0 %v942
      %1067 = vmatpush.msra.mxu0 %v941
      %1068 = vmatpush.msra.mxu0 %v940
      %1069 = vmatpush.msra.mxu0 %v939
      %1070 = vmatpush.msra.mxu0 %v938
      %1071 = vmatpush.msra.mxu0 %v937
      %1072 = vmatpush.msra.mxu0 %v936
      %1073 = vmatmul.f32.gmra.mxu0 %v340
      %v1074 = vpop.f32.mrf.mxu0
      %v1075 = vadd.f32 %v988, %v1074
      %1076 = vdwg.mxu0
      %v1078 = vsel %vm244, %v936, 0
      %v1081 = vsel %vm244, %v937, 0
      %v1084 = vsel %vm244, %v938, 0
      %v1087 = vsel %vm244, %v939, 0
      %v1090 = vsel %vm244, %v940, 0
      %v1093 = vsel %vm244, %v941, 0
      %v1096 = vsel %vm244, %v942, 0
      %v1099 = vsel %vm244, %v943, 0
      %v1102 = vsel %vm244, %v944, 0
      %v1105 = vsel %vm244, %v945, 0
      %v1108 = vsel %vm244, %v946, 0
      %v1111 = vsel %vm244, %v947, 0
      %v1114 = vsel %vm244, %v948, 0
      %v1117 = vsel %vm244, %v949, 0
      %v1119 = vsel %vm244, %v950, 0
      %1121 = vmatpush.xpose.msra.mxu0 0.0
      %1122 = vmatpush.xpose.msra.mxu0 %v1119
      %1123 = vmatpush.xpose.msra.mxu0 %v1117
      %1124 = vmatpush.xpose.msra.mxu0 %v1114
      %1125 = vmatpush.xpose.msra.mxu0 %v1111
      %1126 = vmatpush.xpose.msra.mxu0 %v1108
      %1127 = vmatpush.xpose.msra.mxu0 %v1105
      %1128 = vmatpush.xpose.msra.mxu0 %v1102
      %1129 = vmatpush.xpose.msra.mxu0 %v1099
      %1130 = vmatpush.xpose.msra.mxu0 %v1096
      %1131 = vmatpush.xpose.msra.mxu0 %v1093
      %1132 = vmatpush.xpose.msra.mxu0 %v1090
      %1133 = vmatpush.xpose.msra.mxu0 %v1087
      %1134 = vmatpush.xpose.msra.mxu0 %v1084
      %1135 = vmatpush.xpose.msra.mxu0 %v1081
      %1136 = vmatpush.xpose.msra.mxu0 %v1078
      %1137 = vmatmul.f32.gmra.mxu0 %v366
      %v1138 = vpop.f32.mrf.mxu0
      %v1139 = vadd.f32 %v1052, %v1138
      %1140 = vdwg.mxu0
      %v1141 = vadd.f32 %v1139, %v435
      %v1142 = vperm.slane %v1141, 0
      %v1143 = vlaneseq
      %v1144 = vshrl.u32 %v1143, 7
      %1146 = vset.pattern.permute.xlu0 %v1144
      %1147 = vperm.xlu0 %1146, %v1142
      %v1148 = vpop.permute.xlu0 %1147
      %v1149 = vlaneseq
      %v1150 = vshrl.u32 %v1149, 7
      %v1151 = vadd.s32 %v1150, 8
      %1152 = vset.pattern.permute.xlu0 %v1151
      %1153 = vperm.xlu0 %1152, %v1142
      %v1154 = vpop.permute.xlu0 %1153
      %v1155 = vlaneseq
      %v1156 = vshrl.u32 %v1155, 7
      %v1157 = vadd.s32 %v1156, 16
      %1158 = vset.pattern.permute.xlu0 %v1157
      %1159 = vperm.xlu0 %1158, %v1142
      %v1160 = vpop.permute.xlu0 %1159
      %v1161 = vlaneseq
      %v1162 = vshrl.u32 %v1161, 7
      %v1163 = vadd.s32 %v1162, 24
      %1164 = vset.pattern.permute.xlu0 %v1163
      %1165 = vperm.xlu0 %1164, %v1142
      %v1166 = vpop.permute.xlu0 %1165
      %v1167 = vlaneseq
      %v1168 = vshrl.u32 %v1167, 7
      %v1169 = vadd.s32 %v1168, 32
      %1170 = vset.pattern.permute.xlu0 %v1169
      %1171 = vperm.xlu0 %1170, %v1142
      %v1172 = vpop.permute.xlu0 %1171
      %v1173 = vlaneseq
      %v1174 = vshrl.u32 %v1173, 7
      %v1175 = vadd.s32 %v1174, 40
      %1176 = vset.pattern.permute.xlu0 %v1175
      %1177 = vperm.xlu0 %1176, %v1142
      %v1178 = vpop.permute.xlu0 %1177
      %v1179 = vlaneseq
      %v1180 = vshrl.u32 %v1179, 7
      %v1181 = vadd.s32 %v1180, 48
      %1182 = vset.pattern.permute.xlu0 %v1181
      %1183 = vperm.xlu0 %1182, %v1142
      %v1184 = vpop.permute.xlu0 %1183
      %v1185 = vlaneseq
      %v1186 = vshrl.u32 %v1185, 7
      %v1187 = vadd.s32 %v1186, 56
      %1188 = vset.pattern.permute.xlu0 %v1187
      %1189 = vperm.xlu0 %1188, %v1142
      %v1190 = vpop.permute.xlu0 %1189
      %v1191 = vlaneseq
      %v1192 = vshrl.u32 %v1191, 7
      %v1193 = vadd.s32 %v1192, 64
      %1194 = vset.pattern.permute.xlu0 %v1193
      %1195 = vperm.xlu0 %1194, %v1142
      %v1196 = vpop.permute.xlu0 %1195
      %v1197 = vlaneseq
      %v1198 = vshrl.u32 %v1197, 7
      %v1199 = vadd.s32 %v1198, 72
      %1200 = vset.pattern.permute.xlu0 %v1199
      %1201 = vperm.xlu0 %1200, %v1142
      %v1202 = vpop.permute.xlu0 %1201
      %v1203 = vlaneseq
      %v1204 = vshrl.u32 %v1203, 7
      %v1205 = vadd.s32 %v1204, 80
      %1206 = vset.pattern.permute.xlu0 %v1205
      %1207 = vperm.xlu0 %1206, %v1142
      %v1208 = vpop.permute.xlu0 %1207
      %v1209 = vlaneseq
      %v1210 = vshrl.u32 %v1209, 7
      %v1211 = vadd.s32 %v1210, 88
      %1212 = vset.pattern.permute.xlu0 %v1211
      %1213 = vperm.xlu0 %1212, %v1142
      %v1214 = vpop.permute.xlu0 %1213
      %v1215 = vlaneseq
      %v1216 = vshrl.u32 %v1215, 7
      %v1217 = vadd.s32 %v1216, 96
      %1218 = vset.pattern.permute.xlu0 %v1217
      %1219 = vperm.xlu0 %1218, %v1142
      %v1220 = vpop.permute.xlu0 %1219
      %v1221 = vlaneseq
      %v1222 = vshrl.u32 %v1221, 7
      %v1223 = vadd.s32 %v1222, 104
      %1224 = vset.pattern.permute.xlu0 %v1223
      %1225 = vperm.xlu0 %1224, %v1142
      %v1226 = vpop.permute.xlu0 %1225
      %v1227 = vlaneseq
      %v1228 = vshrl.u32 %v1227, 7
      %v1229 = vadd.s32 %v1228, 112
      %1230 = vset.pattern.permute.xlu0 %v1229
      %1231 = vperm.xlu0 %1230, %v1142
      %v1232 = vpop.permute.xlu0 %1231
      %v1233 = vperm.slane %v1141, 1
      %v1234 = vlaneseq
      %v1235 = vshrl.u32 %v1234, 7
      %1237 = vset.pattern.permute.xlu0 %v1235
      %1238 = vperm.xlu0 %1237, %v1233
      %v1239 = vpop.permute.xlu0 %1238
      %v1240 = vlaneseq
      %v1241 = vshrl.u32 %v1240, 7
      %v1242 = vadd.s32 %v1241, 8
      %1243 = vset.pattern.permute.xlu0 %v1242
      %1244 = vperm.xlu0 %1243, %v1233
      %v1245 = vpop.permute.xlu0 %1244
      %v1246 = vlaneseq
      %v1247 = vshrl.u32 %v1246, 7
      %v1248 = vadd.s32 %v1247, 16
      %1249 = vset.pattern.permute.xlu0 %v1248
      %1250 = vperm.xlu0 %1249, %v1233
      %v1251 = vpop.permute.xlu0 %1250
      %v1252 = vlaneseq
      %v1253 = vshrl.u32 %v1252, 7
      %v1254 = vadd.s32 %v1253, 24
      %1255 = vset.pattern.permute.xlu0 %v1254
      %1256 = vperm.xlu0 %1255, %v1233
      %v1257 = vpop.permute.xlu0 %1256
      %v1258 = vlaneseq
      %v1259 = vshrl.u32 %v1258, 7
      %v1260 = vadd.s32 %v1259, 32
      %1261 = vset.pattern.permute.xlu0 %v1260
      %1262 = vperm.xlu0 %1261, %v1233
      %v1263 = vpop.permute.xlu0 %1262
      %v1264 = vlaneseq
      %v1265 = vshrl.u32 %v1264, 7
      %v1266 = vadd.s32 %v1265, 40
      %1267 = vset.pattern.permute.xlu0 %v1266
      %1268 = vperm.xlu0 %1267, %v1233
      %v1269 = vpop.permute.xlu0 %1268
      %v1270 = vlaneseq
      %v1271 = vshrl.u32 %v1270, 7
      %v1272 = vadd.s32 %v1271, 48
      %1273 = vset.pattern.permute.xlu0 %v1272
      %1274 = vperm.xlu0 %1273, %v1233
      %v1275 = vpop.permute.xlu0 %1274
      %v1276 = vlaneseq
      %v1277 = vshrl.u32 %v1276, 7
      %v1278 = vadd.s32 %v1277, 56
      %1279 = vset.pattern.permute.xlu0 %v1278
      %1280 = vperm.xlu0 %1279, %v1233
      %v1281 = vpop.permute.xlu0 %1280
      %v1282 = vlaneseq
      %v1283 = vshrl.u32 %v1282, 7
      %v1284 = vadd.s32 %v1283, 64
      %1285 = vset.pattern.permute.xlu0 %v1284
      %1286 = vperm.xlu0 %1285, %v1233
      %v1287 = vpop.permute.xlu0 %1286
      %v1288 = vlaneseq
      %v1289 = vshrl.u32 %v1288, 7
      %v1290 = vadd.s32 %v1289, 72
      %1291 = vset.pattern.permute.xlu0 %v1290
      %1292 = vperm.xlu0 %1291, %v1233
      %v1293 = vpop.permute.xlu0 %1292
      %v1294 = vlaneseq
      %v1295 = vshrl.u32 %v1294, 7
      %v1296 = vadd.s32 %v1295, 80
      %1297 = vset.pattern.permute.xlu0 %v1296
      %1298 = vperm.xlu0 %1297, %v1233
      %v1299 = vpop.permute.xlu0 %1298
      %v1300 = vlaneseq
      %v1301 = vshrl.u32 %v1300, 7
      %v1302 = vadd.s32 %v1301, 88
      %1303 = vset.pattern.permute.xlu0 %v1302
      %1304 = vperm.xlu0 %1303, %v1233
      %v1305 = vpop.permute.xlu0 %1304
      %v1306 = vlaneseq
      %v1307 = vshrl.u32 %v1306, 7
      %v1308 = vadd.s32 %v1307, 96
      %1309 = vset.pattern.permute.xlu0 %v1308
      %1310 = vperm.xlu0 %1309, %v1233
      %v1311 = vpop.permute.xlu0 %1310
      %v1312 = vlaneseq
      %v1313 = vshrl.u32 %v1312, 7
      %v1314 = vadd.s32 %v1313, 104
      %1315 = vset.pattern.permute.xlu0 %v1314
      %1316 = vperm.xlu0 %1315, %v1233
      %v1317 = vpop.permute.xlu0 %1316
      %v1318 = vlaneseq
      %v1319 = vshrl.u32 %v1318, 7
      %v1320 = vadd.s32 %v1319, 112
      %1321 = vset.pattern.permute.xlu0 %v1320
      %1322 = vperm.xlu0 %1321, %v1233
      %v1323 = vpop.permute.xlu0 %1322
      %v1324 = vperm.slane %v1141, 2
      %v1325 = vlaneseq
      %v1326 = vshrl.u32 %v1325, 7
      %1328 = vset.pattern.permute.xlu0 %v1326
      %1329 = vperm.xlu0 %1328, %v1324
      %v1330 = vpop.permute.xlu0 %1329
      %v1331 = vlaneseq
      %v1332 = vshrl.u32 %v1331, 7
      %v1333 = vadd.s32 %v1332, 8
      %1334 = vset.pattern.permute.xlu0 %v1333
      %1335 = vperm.xlu0 %1334, %v1324
      %v1336 = vpop.permute.xlu0 %1335
      %v1337 = vlaneseq
      %v1338 = vshrl.u32 %v1337, 7
      %v1339 = vadd.s32 %v1338, 16
      %1340 = vset.pattern.permute.xlu0 %v1339
      %1341 = vperm.xlu0 %1340, %v1324
      %v1342 = vpop.permute.xlu0 %1341
      %v1343 = vlaneseq
      %v1344 = vshrl.u32 %v1343, 7
      %v1345 = vadd.s32 %v1344, 24
      %1346 = vset.pattern.permute.xlu0 %v1345
      %1347 = vperm.xlu0 %1346, %v1324
      %v1348 = vpop.permute.xlu0 %1347
      %v1349 = vlaneseq
      %v1350 = vshrl.u32 %v1349, 7
      %v1351 = vadd.s32 %v1350, 32
      %1352 = vset.pattern.permute.xlu0 %v1351
      %1353 = vperm.xlu0 %1352, %v1324
      %v1354 = vpop.permute.xlu0 %1353
      %v1355 = vlaneseq
      %v1356 = vshrl.u32 %v1355, 7
      %v1357 = vadd.s32 %v1356, 40
      %1358 = vset.pattern.permute.xlu0 %v1357
      %1359 = vperm.xlu0 %1358, %v1324
      %v1360 = vpop.permute.xlu0 %1359
      %v1361 = vlaneseq
      %v1362 = vshrl.u32 %v1361, 7
      %v1363 = vadd.s32 %v1362, 48
      %1364 = vset.pattern.permute.xlu0 %v1363
      %1365 = vperm.xlu0 %1364, %v1324
      %v1366 = vpop.permute.xlu0 %1365
      %v1367 = vlaneseq
      %v1368 = vshrl.u32 %v1367, 7
      %v1369 = vadd.s32 %v1368, 56
      %1370 = vset.pattern.permute.xlu0 %v1369
      %1371 = vperm.xlu0 %1370, %v1324
      %v1372 = vpop.permute.xlu0 %1371
      %v1373 = vlaneseq
      %v1374 = vshrl.u32 %v1373, 7
      %v1375 = vadd.s32 %v1374, 64
      %1376 = vset.pattern.permute.xlu0 %v1375
      %1377 = vperm.xlu0 %1376, %v1324
      %v1378 = vpop.permute.xlu0 %1377
      %v1379 = vlaneseq
      %v1380 = vshrl.u32 %v1379, 7
      %v1381 = vadd.s32 %v1380, 72
      %1382 = vset.pattern.permute.xlu0 %v1381
      %1383 = vperm.xlu0 %1382, %v1324
      %v1384 = vpop.permute.xlu0 %1383
      %v1385 = vlaneseq
      %v1386 = vshrl.u32 %v1385, 7
      %v1387 = vadd.s32 %v1386, 80
      %1388 = vset.pattern.permute.xlu0 %v1387
      %1389 = vperm.xlu0 %1388, %v1324
      %v1390 = vpop.permute.xlu0 %1389
      %v1391 = vlaneseq
      %v1392 = vshrl.u32 %v1391, 7
      %v1393 = vadd.s32 %v1392, 88
      %1394 = vset.pattern.permute.xlu0 %v1393
      %1395 = vperm.xlu0 %1394, %v1324
      %v1396 = vpop.permute.xlu0 %1395
      %v1397 = vlaneseq
      %v1398 = vshrl.u32 %v1397, 7
      %v1399 = vadd.s32 %v1398, 96
      %1400 = vset.pattern.permute.xlu0 %v1399
      %1401 = vperm.xlu0 %1400, %v1324
      %v1402 = vpop.permute.xlu0 %1401
      %v1403 = vlaneseq
      %v1404 = vshrl.u32 %v1403, 7
      %v1405 = vadd.s32 %v1404, 104
      %1406 = vset.pattern.permute.xlu0 %v1405
      %1407 = vperm.xlu0 %1406, %v1324
      %v1408 = vpop.permute.xlu0 %1407
      %v1409 = vlaneseq
      %v1410 = vshrl.u32 %v1409, 7
      %v1411 = vadd.s32 %v1410, 112
      %1412 = vset.pattern.permute.xlu0 %v1411
      %1413 = vperm.xlu0 %1412, %v1324
      %v1414 = vpop.permute.xlu0 %1413
      %v1415 = vperm.slane %v1141, 3
      %v1416 = vlaneseq
      %v1417 = vshrl.u32 %v1416, 7
      %1419 = vset.pattern.permute.xlu0 %v1417
      %1420 = vperm.xlu0 %1419, %v1415
      %v1421 = vpop.permute.xlu0 %1420
      %v1422 = vlaneseq
      %v1423 = vshrl.u32 %v1422, 7
      %v1424 = vadd.s32 %v1423, 8
      %1425 = vset.pattern.permute.xlu0 %v1424
      %1426 = vperm.xlu0 %1425, %v1415
      %v1427 = vpop.permute.xlu0 %1426
      %v1428 = vlaneseq
      %v1429 = vshrl.u32 %v1428, 7
      %v1430 = vadd.s32 %v1429, 16
      %1431 = vset.pattern.permute.xlu0 %v1430
      %1432 = vperm.xlu0 %1431, %v1415
      %v1433 = vpop.permute.xlu0 %1432
      %v1434 = vlaneseq
      %v1435 = vshrl.u32 %v1434, 7
      %v1436 = vadd.s32 %v1435, 24
      %1437 = vset.pattern.permute.xlu0 %v1436
      %1438 = vperm.xlu0 %1437, %v1415
      %v1439 = vpop.permute.xlu0 %1438
      %v1440 = vlaneseq
      %v1441 = vshrl.u32 %v1440, 7
      %v1442 = vadd.s32 %v1441, 32
      %1443 = vset.pattern.permute.xlu0 %v1442
      %1444 = vperm.xlu0 %1443, %v1415
      %v1445 = vpop.permute.xlu0 %1444
      %v1446 = vlaneseq
      %v1447 = vshrl.u32 %v1446, 7
      %v1448 = vadd.s32 %v1447, 40
      %1449 = vset.pattern.permute.xlu0 %v1448
      %1450 = vperm.xlu0 %1449, %v1415
      %v1451 = vpop.permute.xlu0 %1450
      %v1452 = vlaneseq
      %v1453 = vshrl.u32 %v1452, 7
      %v1454 = vadd.s32 %v1453, 48
      %1455 = vset.pattern.permute.xlu0 %v1454
      %1456 = vperm.xlu0 %1455, %v1415
      %v1457 = vpop.permute.xlu0 %1456
      %v1458 = vlaneseq
      %v1459 = vshrl.u32 %v1458, 7
      %v1460 = vadd.s32 %v1459, 56
      %1461 = vset.pattern.permute.xlu0 %v1460
      %1462 = vperm.xlu0 %1461, %v1415
      %v1463 = vpop.permute.xlu0 %1462
      %v1464 = vlaneseq
      %v1465 = vshrl.u32 %v1464, 7
      %v1466 = vadd.s32 %v1465, 64
      %1467 = vset.pattern.permute.xlu0 %v1466
      %1468 = vperm.xlu0 %1467, %v1415
      %v1469 = vpop.permute.xlu0 %1468
      %v1470 = vlaneseq
      %v1471 = vshrl.u32 %v1470, 7
      %v1472 = vadd.s32 %v1471, 72
      %1473 = vset.pattern.permute.xlu0 %v1472
      %1474 = vperm.xlu0 %1473, %v1415
      %v1475 = vpop.permute.xlu0 %1474
      %v1476 = vlaneseq
      %v1477 = vshrl.u32 %v1476, 7
      %v1478 = vadd.s32 %v1477, 80
      %1479 = vset.pattern.permute.xlu0 %v1478
      %1480 = vperm.xlu0 %1479, %v1415
      %v1481 = vpop.permute.xlu0 %1480
      %v1482 = vlaneseq
      %v1483 = vshrl.u32 %v1482, 7
      %v1484 = vadd.s32 %v1483, 88
      %1485 = vset.pattern.permute.xlu0 %v1484
      %1486 = vperm.xlu0 %1485, %v1415
      %v1487 = vpop.permute.xlu0 %1486
      %v1488 = vlaneseq
      %v1489 = vshrl.u32 %v1488, 7
      %v1490 = vadd.s32 %v1489, 96
      %1491 = vset.pattern.permute.xlu0 %v1490
      %1492 = vperm.xlu0 %1491, %v1415
      %v1493 = vpop.permute.xlu0 %1492
      %v1494 = vlaneseq
      %v1495 = vshrl.u32 %v1494, 7
      %v1496 = vadd.s32 %v1495, 104
      %1497 = vset.pattern.permute.xlu0 %v1496
      %1498 = vperm.xlu0 %1497, %v1415
      %v1499 = vpop.permute.xlu0 %1498
      %v1500 = vlaneseq
      %v1501 = vshrl.u32 %v1500, 7
      %v1502 = vadd.s32 %v1501, 112
      %1503 = vset.pattern.permute.xlu0 %v1502
      %1504 = vperm.xlu0 %1503, %v1415
      %v1505 = vpop.permute.xlu0 %1504
      %v1507 = vrot.slane %v1075, 1
      %v1508 = vrot.slane %v1075, 2
      %v1509 = vrot.slane %v1075, 3
      %v1510 = vperm.slane %v1075, 0
      %v1511 = vperm.slane %v1507, 0
      %v1512 = vperm.slane %v1508, 0
      %v1513 = vperm.slane %v1509, 0
      %v1518 = vadd.f32 %v1148, %v1510
      %v1519 = vadd.f32 %v1154, %v1510
      %v1520 = vadd.f32 %v1160, %v1510
      %v1521 = vadd.f32 %v1166, %v1510
      %v1522 = vadd.f32 %v1172, %v1510
      %v1523 = vadd.f32 %v1178, %v1510
      %v1524 = vadd.f32 %v1184, %v1510
      %v1525 = vadd.f32 %v1190, %v1510
      %v1526 = vadd.f32 %v1196, %v1510
      %v1527 = vadd.f32 %v1202, %v1510
      %v1528 = vadd.f32 %v1208, %v1510
      %v1529 = vadd.f32 %v1214, %v1510
      %v1530 = vadd.f32 %v1220, %v1510
      %v1531 = vadd.f32 %v1226, %v1510
      %v1532 = vadd.f32 %v1232, %v1510
      %v1533 = vadd.f32 %v1239, %v1511
      %v1534 = vadd.f32 %v1245, %v1511
      %v1535 = vadd.f32 %v1251, %v1511
      %v1536 = vadd.f32 %v1257, %v1511
      %v1537 = vadd.f32 %v1263, %v1511
      %v1538 = vadd.f32 %v1269, %v1511
      %v1539 = vadd.f32 %v1275, %v1511
      %v1540 = vadd.f32 %v1281, %v1511
      %v1541 = vadd.f32 %v1287, %v1511
      %v1542 = vadd.f32 %v1293, %v1511
      %v1543 = vadd.f32 %v1299, %v1511
      %v1544 = vadd.f32 %v1305, %v1511
      %v1545 = vadd.f32 %v1311, %v1511
      %v1546 = vadd.f32 %v1317, %v1511
      %v1547 = vadd.f32 %v1323, %v1511
      %v1548 = vadd.f32 %v1330, %v1512
      %v1549 = vadd.f32 %v1336, %v1512
      %v1550 = vadd.f32 %v1342, %v1512
      %v1551 = vadd.f32 %v1348, %v1512
      %v1552 = vadd.f32 %v1354, %v1512
      %v1553 = vadd.f32 %v1360, %v1512
      %v1554 = vadd.f32 %v1366, %v1512
      %v1555 = vadd.f32 %v1372, %v1512
      %v1556 = vadd.f32 %v1378, %v1512
      %v1557 = vadd.f32 %v1384, %v1512
      %v1558 = vadd.f32 %v1390, %v1512
      %v1559 = vadd.f32 %v1396, %v1512
      %v1560 = vadd.f32 %v1402, %v1512
      %v1561 = vadd.f32 %v1408, %v1512
      %v1562 = vadd.f32 %v1414, %v1512
      %v1563 = vadd.f32 %v1421, %v1513
      %v1564 = vadd.f32 %v1427, %v1513
      %v1565 = vadd.f32 %v1433, %v1513
      %v1566 = vadd.f32 %v1439, %v1513
      %v1567 = vadd.f32 %v1445, %v1513
      %v1568 = vadd.f32 %v1451, %v1513
      %v1569 = vadd.f32 %v1457, %v1513
      %v1570 = vadd.f32 %v1463, %v1513
      %v1571 = vadd.f32 %v1469, %v1513
      %v1572 = vadd.f32 %v1475, %v1513
      %v1573 = vadd.f32 %v1481, %v1513
      %v1574 = vadd.f32 %v1487, %v1513
      %v1575 = vadd.f32 %v1493, %v1513
      %v1576 = vadd.f32 %v1499, %v1513
      %v1577 = vadd.f32 %v1505, %v1513
      %s1578 = scalar_lea.vmem %s204, 480
      %1579 = vst.msk [vmem:[%s1578] sm:$0xff] %vm244, %v1518
      %1580 = vst.msk [vmem:[%s1578 + $0x8] sm:$0xff] %vm244, %v1519
      %1581 = vst.msk [vmem:[%s1578 + $0x10] sm:$0xff] %vm244, %v1520
      %1582 = vst.msk [vmem:[%s1578 + $0x18] sm:$0xff] %vm244, %v1521
      %1583 = vst.msk [vmem:[%s1578 + $0x20] sm:$0xff] %vm244, %v1522
      %1584 = vst.msk [vmem:[%s1578 + $0x28] sm:$0xff] %vm244, %v1523
      %1585 = vst.msk [vmem:[%s1578 + $0x30] sm:$0xff] %vm244, %v1524
      %1586 = vst.msk [vmem:[%s1578 + $0x38] sm:$0xff] %vm244, %v1525
      %1587 = vst.msk [vmem:[%s1578 + $0x40] sm:$0xff] %vm244, %v1526
      %1588 = vst.msk [vmem:[%s1578 + $0x48] sm:$0xff] %vm244, %v1527
      %1589 = vst.msk [vmem:[%s1578 + $0x50] sm:$0xff] %vm244, %v1528
      %1590 = vst.msk [vmem:[%s1578 + $0x58] sm:$0xff] %vm244, %v1529
      %1591 = vst.msk [vmem:[%s1578 + $0x60] sm:$0xff] %vm244, %v1530
      %1592 = vst.msk [vmem:[%s1578 + $0x68] sm:$0xff] %vm244, %v1531
      %1593 = vst.msk [vmem:[%s1578 + $0x70] sm:$0xf] %vm888, %v1532
      %1594 = vst.msk [vmem:[%s1578 + $0x78] sm:$0xff] %vm244, %v1533
      %1595 = vst.msk [vmem:[%s1578 + $0x80] sm:$0xff] %vm244, %v1534
      %1596 = vst.msk [vmem:[%s1578 + $0x88] sm:$0xff] %vm244, %v1535
      %1597 = vst.msk [vmem:[%s1578 + $0x90] sm:$0xff] %vm244, %v1536
      %1598 = vst.msk [vmem:[%s1578 + $0x98] sm:$0xff] %vm244, %v1537
      %1599 = vst.msk [vmem:[%s1578 + $0xa0] sm:$0xff] %vm244, %v1538
      %1600 = vst.msk [vmem:[%s1578 + $0xa8] sm:$0xff] %vm244, %v1539
      %1601 = vst.msk [vmem:[%s1578 + $0xb0] sm:$0xff] %vm244, %v1540
      %1602 = vst.msk [vmem:[%s1578 + $0xb8] sm:$0xff] %vm244, %v1541
      %1603 = vst.msk [vmem:[%s1578 + $0xc0] sm:$0xff] %vm244, %v1542
      %1604 = vst.msk [vmem:[%s1578 + $0xc8] sm:$0xff] %vm244, %v1543
      %1605 = vst.msk [vmem:[%s1578 + $0xd0] sm:$0xff] %vm244, %v1544
      %1606 = vst.msk [vmem:[%s1578 + $0xd8] sm:$0xff] %vm244, %v1545
      %1607 = vst.msk [vmem:[%s1578 + $0xe0] sm:$0xff] %vm244, %v1546
      %1608 = vst.msk [vmem:[%s1578 + $0xe8] sm:$0xf] %vm888, %v1547
      %1609 = vst.msk [vmem:[%s1578 + $0xf0] sm:$0xff] %vm244, %v1548
      %1610 = vst.msk [vmem:[%s1578 + $0xf8] sm:$0xff] %vm244, %v1549
      %1611 = vst.msk [vmem:[%s1578 + $0x100] sm:$0xff] %vm244, %v1550
      %1612 = vst.msk [vmem:[%s1578 + $0x108] sm:$0xff] %vm244, %v1551
      %1613 = vst.msk [vmem:[%s1578 + $0x110] sm:$0xff] %vm244, %v1552
      %1614 = vst.msk [vmem:[%s1578 + $0x118] sm:$0xff] %vm244, %v1553
      %1615 = vst.msk [vmem:[%s1578 + $0x120] sm:$0xff] %vm244, %v1554
      %1616 = vst.msk [vmem:[%s1578 + $0x128] sm:$0xff] %vm244, %v1555
      %1617 = vst.msk [vmem:[%s1578 + $0x130] sm:$0xff] %vm244, %v1556
      %1618 = vst.msk [vmem:[%s1578 + $0x138] sm:$0xff] %vm244, %v1557
      %1619 = vst.msk [vmem:[%s1578 + $0x140] sm:$0xff] %vm244, %v1558
      %1620 = vst.msk [vmem:[%s1578 + $0x148] sm:$0xff] %vm244, %v1559
      %1621 = vst.msk [vmem:[%s1578 + $0x150] sm:$0xff] %vm244, %v1560
      %1622 = vst.msk [vmem:[%s1578 + $0x158] sm:$0xff] %vm244, %v1561
      %1623 = vst.msk [vmem:[%s1578 + $0x160] sm:$0xf] %vm888, %v1562
      %1624 = vst.msk [vmem:[%s1578 + $0x168] sm:$0xff] %vm244, %v1563
      %1625 = vst.msk [vmem:[%s1578 + $0x170] sm:$0xff] %vm244, %v1564
      %1626 = vst.msk [vmem:[%s1578 + $0x178] sm:$0xff] %vm244, %v1565
      %1627 = vst.msk [vmem:[%s1578 + $0x180] sm:$0xff] %vm244, %v1566
      %1628 = vst.msk [vmem:[%s1578 + $0x188] sm:$0xff] %vm244, %v1567
      %1629 = vst.msk [vmem:[%s1578 + $0x190] sm:$0xff] %vm244, %v1568
      %1630 = vst.msk [vmem:[%s1578 + $0x198] sm:$0xff] %vm244, %v1569
      %1631 = vst.msk [vmem:[%s1578 + $0x1a0] sm:$0xff] %vm244, %v1570
      %1632 = vst.msk [vmem:[%s1578 + $0x1a8] sm:$0xff] %vm244, %v1571
      %1633 = vst.msk [vmem:[%s1578 + $0x1b0] sm:$0xff] %vm244, %v1572
      %1634 = vst.msk [vmem:[%s1578 + $0x1b8] sm:$0xff] %vm244, %v1573
      %1635 = vst.msk [vmem:[%s1578 + $0x1c0] sm:$0xff] %vm244, %v1574
      %1636 = vst.msk [vmem:[%s1578 + $0x1c8] sm:$0xff] %vm244, %v1575
      %1637 = vst.msk [vmem:[%s1578 + $0x1d0] sm:$0xff] %vm244, %v1576
      %1638 = vst.msk [vmem:[%s1578 + $0x1d8] sm:$0xf] %vm888, %v1577
      %s1639 = smul.u32 2, %s15
      %p1640 = scmp.lt.s32.totalorder %s1639, 3
      %s1641 = scalar_select %p1640, %s1639, 3
      %s1642 = smul.addr %s1641, 60
      %s1643 = smul.addr %s1642, 8
      %s1644 = scalar_lea.vmem %s4, %s1643
      // Predicated region
      $region37: #{tpu_custom_call.1} parent=35 // pred_check
        %p1645 = pneg %p122
      $region38: #{tpu_custom_call.1} parent=35 // pred_check_branch
        %1647 = sbr.rel (%p1645) target = $region40
      $region39: #{tpu_custom_call.1} parent=35 // pred_region
        %s1648 = smul.u32 2, %s15
      $region40: #{tpu_custom_call.1} parent=35 // pred_fallthru
        _
    $region36: #{tpu_custom_call.1} parent=5 // pred_fallthru
      _
    %p1649 = scmp.le.s32.totalorder 2, %s10
    // Predicated region
    $region41: #{tpu_custom_call.1} parent=5 // pred_check
      %p1650 = pneg %p1649
    $region42: #{tpu_custom_call.1} parent=5 // pred_check_branch
      %1652 = sbr.rel (%p1650) target = $region44
    $region43: #{tpu_custom_call.1} parent=5 // pred_region
      %s1653 = ssub.s32 %s10, 2
      // Predicated region
      $region45: #{tpu_custom_call.1} parent=43 // pred_check
        %p1654 = pneg %p128
      $region46: #{tpu_custom_call.1} parent=43 // pred_check_branch
        %1656 = sbr.rel (%p1654) target = $region48
      $region47: #{tpu_custom_call.1} parent=43 // pred_region
        %s1657 = smul.u32 2, %s16
        %p1658 = scmp.lt.s32.totalorder %s1657, 3
        %s1659 = scalar_select %p1658, %s1657, 3
        %s1660 = smul.addr %s1659, 60
        %s1661 = smul.addr %s1660, 8
        %s1662 = scalar_lea.vmem %s4, %s1661
      $region48: #{tpu_custom_call.1} parent=43 // pred_fallthru
        _
    $region44: #{tpu_custom_call.1} parent=5 // pred_fallthru
      _
  $region6: #{tpu_custom_call.1} parent=0 // loop_footer
    %s14 = sadd.s32 1, %s10
  $region7: #{tpu_custom_call.1} parent=0 // loop_footer_branch
    %9 = sbr.rel target = $region3
  $region8: #{tpu_custom_call.1} parent=0 // loop_exit
    _

</llo_original>
